<compile_context>
chip_gen: v7x
topology: tpu7x:2x2x1
jax: 0.10.0
libtpu: 0.0.40
codegen_flags: <defaults>
</compile_context>

<pallas_src>
import jax
import jax.numpy as jnp
from jax.experimental import pallas as pl
from jax.experimental.pallas import tpu as pltpu

LANE = 128
HEAD_LANES = 8   # lane 0 = propensity, 1 = y0, 2 = y1, rest zero padding


def _round_up(n, m):
    return (n + m - 1) // m * m


def _elu(v):
    # ELU(alpha=1).  exp is clamped so the discarded branch never overflows.
    return jnp.where(v > 0, v, jnp.exp(jnp.minimum(v, 0.0)) - 1.0)


def _sigmoid(v):
    return 1.0 / (1.0 + jnp.exp(-v))


def dragonnet_kernel(x_ref,
                     w1_ref, b1_ref,
                     w2_ref, b2_ref,
                     w3_ref, b3_ref,
                     wh_ref, bh_ref,
                     out_ref):
    # Shared trunk: 3 x (Linear + ELU); dropout is identity at inference.
    # x is cast to bf16 in-kernel (cheap VPU cast, hidden under MXU/DMA slack).
    h = jnp.dot(x_ref[...].astype(jnp.bfloat16), w1_ref[...],
                preferred_element_type=jnp.float32) + b1_ref[...]
    h = _elu(h).astype(jnp.bfloat16)
    h = jnp.dot(h, w2_ref[...],
                preferred_element_type=jnp.float32) + b2_ref[...]
    h = _elu(h).astype(jnp.bfloat16)
    h = jnp.dot(h, w3_ref[...],
                preferred_element_type=jnp.float32) + b3_ref[...]
    h = _elu(h).astype(jnp.bfloat16)

    # Fused heads: one [H3p, HEAD_LANES] matmul.  Only 8 output lanes are
    # written back to HBM (vs. 128 before) -> ~16x less writeback traffic.
    heads = jnp.dot(h, wh_ref[...],
                    preferred_element_type=jnp.float32) + bh_ref[...]
    lane = jax.lax.broadcasted_iota(jnp.int32, heads.shape, 1)
    out_ref[...] = jnp.where(lane == 0, _sigmoid(heads), heads)


def pack_params(p):
    """Pad hidden widths to 128-lane multiples (exact zero padding), cast
    matmul weights to bf16, and fuse the three heads into one
    [H3p, HEAD_LANES] weight / [1, HEAD_LANES] bias
    (col 0 = propensity, 1 = y0, 2 = y1)."""
    def pad2(a, rows, cols):
        return jnp.pad(a, ((0, rows - a.shape[0]), (0, cols - a.shape[1])))

    D = p["W1"].shape[0]
    H1, H2, H3 = p["W1"].shape[1], p["W2"].shape[1], p["W3"].shape[1]
    H1p, H2p, H3p = (_round_up(h, LANE) for h in (H1, H2, H3))

    packed = {
        "W1": pad2(p["W1"], D, H1p).astype(jnp.bfloat16),
        "b1": pad2(p["b1"], 1, H1p).astype(jnp.float32),
        "W2": pad2(p["W2"], H1p, H2p).astype(jnp.bfloat16),
        "b2": pad2(p["b2"], 1, H2p).astype(jnp.float32),
        "W3": pad2(p["W3"], H2p, H3p).astype(jnp.bfloat16),
        "b3": pad2(p["b3"], 1, H3p).astype(jnp.float32),
    }
    wh = jnp.concatenate([p["Wp"], p["W0"], p["Wo1"]], axis=1)   # [H3, 3]
    bh = jnp.concatenate([p["bp"], p["b0"], p["bo1"]], axis=1)   # [1, 3]
    packed["Wh"] = pad2(wh, H3p, HEAD_LANES).astype(jnp.bfloat16)
    packed["bh"] = pad2(bh, 1, HEAD_LANES).astype(jnp.float32)
    return packed


def dragonnet_forward(x, packed, *, block_b=1024, min_grid_steps=2):
    """x: [B, D] f32; packed: output of pack_params. Returns (e_x, y0, y1)."""
    B, D = x.shape
    # Tall tiles amortize the ~0.35us per-grid-step overhead; keep >=2 grid
    # steps so dimension_semantics=("parallel",) can shard the batch across
    # v7x's 2 TensorCores.  VMEM at tb=1024 is only a few MiB.
    tb = max(8, min(block_b, _round_up(pl.cdiv(B, min_grid_steps), 8)))
    grid = (pl.cdiv(B, tb),)

    def resident(shape):
        return pl.BlockSpec(shape, lambda i: (0, 0))

    in_specs = [
        pl.BlockSpec((tb, D), lambda i: (i, 0)),          # x: tiled over batch
        resident(packed["W1"].shape), resident(packed["b1"].shape),
        resident(packed["W2"].shape), resident(packed["b2"].shape),
        resident(packed["W3"].shape), resident(packed["b3"].shape),
        resident(packed["Wh"].shape), resident(packed["bh"].shape),
    ]
    out_spec = pl.BlockSpec((tb, HEAD_LANES), lambda i: (i, 0))
    out_shape = jax.ShapeDtypeStruct((B, HEAD_LANES), jnp.float32)

    H1p = packed["W1"].shape[1]
    H2p = packed["W2"].shape[1]
    H3p = packed["W3"].shape[1]
    flops = 2 * B * (D * H1p + H1p * H2p + H2p * H3p + H3p * HEAD_LANES)
    transcendentals = B * (H1p + H2p + H3p + HEAD_LANES)    # ELU exps + sigmoid
    param_bytes = sum(int(v.size) * v.dtype.itemsize for v in packed.values())
    bytes_accessed = int(x.size) * 4 + param_bytes + B * HEAD_LANES * 4

    args = (x,
            packed["W1"], packed["b1"],
            packed["W2"], packed["b2"],
            packed["W3"], packed["b3"],
            packed["Wh"], packed["bh"])

    fused = pl.pallas_call(
        dragonnet_kernel,
        out_shape=out_shape,
        grid=grid,
        in_specs=in_specs,
        out_specs=out_spec,
        compiler_params=pltpu.CompilerParams(
            dimension_semantics=("parallel",),
            vmem_limit_bytes=32 * 1024 * 1024),
        cost_estimate=pl.CostEstimate(
            flops=flops,
            transcendentals=transcendentals,
            bytes_accessed=bytes_accessed),
    )(*args)

    e_x = fused[:, 0:1]
    y0 = fused[:, 1:2]
    y1 = fused[:, 2:3]
    return e_x, y0, y1


def init_params(key, input_dim, hidden_sizes=(200, 100, 100)):
    """PyTorch-Linear-style init (U(-k, k), k=1/sqrt(fan_in)); weights [in, out]."""
    params = {}
    dims = [input_dim] + list(hidden_sizes)
    keys = jax.random.split(key, 2 * len(hidden_sizes) + 6)
    ki = 0
    for i, (din, dout) in enumerate(zip(dims[:-1], dims[1:]), start=1):
        bound = 1.0 / jnp.sqrt(jnp.float32(din))
        params[f"W{i}"] = jax.random.uniform(
            keys[ki], (din, dout), jnp.float32, -bound, bound); ki += 1
        params[f"b{i}"] = jax.random.uniform(
            keys[ki], (1, dout), jnp.float32, -bound, bound); ki += 1
    last = dims[-1]
    bound = 1.0 / jnp.sqrt(jnp.float32(last))
    for name in ("Wp", "W0", "Wo1"):
        params[name] = jax.random.uniform(
            keys[ki], (last, 1), jnp.float32, -bound, bound); ki += 1
    for name in ("bp", "b0", "bo1"):
        params[name] = jax.random.uniform(
            keys[ki], (1, 1), jnp.float32, -bound, bound); ki += 1
    return params


def dragonnet_reference_f32(x, p):
    """Pure f32 reference (matches the PyTorch module numerics)."""
    h = x
    for i in (1, 2, 3):
        h = _elu(h @ p[f"W{i}"] + p[f"b{i}"])
    e_x = _sigmoid(h @ p["Wp"] + p["bp"])
    y0 = h @ p["W0"] + p["b0"]
    y1 = h @ p["Wo1"] + p["bo1"]
    return e_x, y0, y1


def dragonnet_reference_mixed(x, p):
    """Reference that mirrors the kernel's dtype choices exactly
    (bf16 matmul operands, f32 accumulation / bias / ELU / sigmoid)."""
    h = x.astype(jnp.bfloat16)
    for i in (1, 2, 3):
        acc = jnp.dot(h, p[f"W{i}"].astype(jnp.bfloat16),
                      preferred_element_type=jnp.float32) + p[f"b{i}"]
        h = _elu(acc).astype(jnp.bfloat16)

    def head(w, b):
        return jnp.dot(h, w.astype(jnp.bfloat16),
                       preferred_element_type=jnp.float32) + b

    return (_sigmoid(head(p["Wp"], p["bp"])),
            head(p["W0"], p["b0"]),
            head(p["Wo1"], p["bo1"]))


if __name__ == "__main__":
    key = jax.random.PRNGKey(0)
    k_param, k_x = jax.random.split(key)

    batch = 256                 # exercises the batch grid (2 steps of TB=128)
    input_dim = 16
    hidden_sizes = (200, 100, 100)   # DragonNet defaults

    params = init_params(k_param, input_dim, hidden_sizes)
    packed = pack_params(params)
    x = jax.random.normal(k_x, (batch, input_dim), jnp.float32)

    fwd = jax.jit(dragonnet_forward)
    e_x, y0, y1 = fwd(x, packed)
    jax.block_until_ready((e_x, y0, y1))

    # Tight check against the dtype-matched reference (only MXU accumulation
    # order differs).
    me_x, my0, my1 = dragonnet_reference_mixed(x, params)
    assert jnp.allclose(e_x, me_x, atol=1e-2, rtol=1e-2)
    assert jnp.allclose(y0, my0, atol=1e-2, rtol=1e-2)
    assert jnp.allclose(y1, my1, atol=1e-2, rtol=1e-2)

    # Looser check against the pure-f32 reference (bf16 matmul error budget).
    fe_x, fy0, fy1 = dragonnet_reference_f32(x, params)
    assert jnp.allclose(e_x, fe_x, atol=6e-2, rtol=6e-2)
    assert jnp.allclose(y0, fy0, atol=6e-2, rtol=6e-2)
    assert jnp.allclose(y1, fy1, atol=6e-2, rtol=6e-2)

    print("KERNEL_OK")
</pallas_src>

<mosaic_0001>
module attributes {stable_mosaic.version = 11 : i64} {
  func.func @dragonnet_kernel(%arg0: i32, %arg1: memref<128x16xf32, #tpu.memory_space<vmem>>, %arg2: memref<16x256xbf16, #tpu.memory_space<vmem>>, %arg3: memref<1x256xf32, #tpu.memory_space<vmem>>, %arg4: memref<256x128xbf16, #tpu.memory_space<vmem>>, %arg5: memref<1x128xf32, #tpu.memory_space<vmem>>, %arg6: memref<128x128xbf16, #tpu.memory_space<vmem>>, %arg7: memref<1x128xf32, #tpu.memory_space<vmem>>, %arg8: memref<128x8xbf16, #tpu.memory_space<vmem>>, %arg9: memref<1x8xf32, #tpu.memory_space<vmem>>, %arg10: memref<128x8xf32, #tpu.memory_space<vmem>>) attributes {dimension_semantics = [#tpu.dimension_semantics<parallel>], iteration_bounds = array<i64: 2>, scalar_prefetch = 0 : i64, scratch_operands = 0 : i64, tpu.core_type = #tpu.core_type<tc>, window_params = [{transform_indices = @transform_0, window_bounds = array<i64: 128, 16>}, {pipeline_mode = #tpu.pipeline_mode<synchronous>, transform_indices = @transform_1, window_bounds = array<i64: 16, 256>}, {pipeline_mode = #tpu.pipeline_mode<synchronous>, transform_indices = @transform_2, window_bounds = array<i64: 1, 256>}, {pipeline_mode = #tpu.pipeline_mode<synchronous>, transform_indices = @transform_3, window_bounds = array<i64: 256, 128>}, {pipeline_mode = #tpu.pipeline_mode<synchronous>, transform_indices = @transform_4, window_bounds = array<i64: 1, 128>}, {pipeline_mode = #tpu.pipeline_mode<synchronous>, transform_indices = @transform_5, window_bounds = array<i64: 128, 128>}, {pipeline_mode = #tpu.pipeline_mode<synchronous>, transform_indices = @transform_6, window_bounds = array<i64: 1, 128>}, {pipeline_mode = #tpu.pipeline_mode<synchronous>, transform_indices = @transform_7, window_bounds = array<i64: 128, 8>}, {pipeline_mode = #tpu.pipeline_mode<synchronous>, transform_indices = @transform_8, window_bounds = array<i64: 1, 8>}, {transform_indices = @transform_9, window_bounds = array<i64: 128, 8>}]} {
    %c0 = arith.constant 0 : index
    %c0_0 = arith.constant 0 : index
    %0 = vector.load %arg1[%c0, %c0_0] : memref<128x16xf32, #tpu.memory_space<vmem>>, vector<128x16xf32>
    %1 = arith.truncf %0 : vector<128x16xf32> to vector<128x16xbf16>
    %c0_1 = arith.constant 0 : index
    %c0_2 = arith.constant 0 : index
    %2 = vector.load %arg2[%c0_1, %c0_2] : memref<16x256xbf16, #tpu.memory_space<vmem>>, vector<16x256xbf16>
    %cst = arith.constant dense<0.000000e+00> : vector<128x256xf32>
    %3 = tpu.matmul %1, %2, %cst {dimension_numbers = #tpu.dot_dimension_numbers<[1], [0], [0], [1], [0, 0, 1, 1], [], []>} : vector<128x16xbf16>, vector<16x256xbf16>, vector<128x256xf32> -> vector<128x256xf32>
    %c0_3 = arith.constant 0 : index
    %c0_4 = arith.constant 0 : index
    %4 = vector.load %arg3[%c0_3, %c0_4] : memref<1x256xf32, #tpu.memory_space<vmem>>, vector<1x256xf32>
    %5 = vector.broadcast %4 : vector<1x256xf32> to vector<128x256xf32>
    %6 = arith.addf %3, %5 : vector<128x256xf32>
    %cst_5 = arith.constant 0.000000e+00 : f32
    %7 = vector.broadcast %cst_5 : f32 to vector<128x256xf32>
    %8 = arith.cmpf ogt, %6, %7 : vector<128x256xf32>
    %cst_6 = arith.constant 0.000000e+00 : f32
    %9 = vector.broadcast %cst_6 : f32 to vector<128x256xf32>
    %10 = arith.minimumf %6, %9 : vector<128x256xf32>
    %11 = math.exp %10 : vector<128x256xf32>
    %cst_7 = arith.constant 1.000000e+00 : f32
    %12 = vector.broadcast %cst_7 : f32 to vector<128x256xf32>
    %13 = arith.subf %11, %12 : vector<128x256xf32>
    %14 = arith.select %8, %6, %13 : vector<128x256xi1>, vector<128x256xf32>
    %15 = arith.truncf %14 : vector<128x256xf32> to vector<128x256xbf16>
    %c0_8 = arith.constant 0 : index
    %c0_9 = arith.constant 0 : index
    %16 = vector.load %arg4[%c0_8, %c0_9] : memref<256x128xbf16, #tpu.memory_space<vmem>>, vector<256x128xbf16>
    %cst_10 = arith.constant dense<0.000000e+00> : vector<128x128xf32>
    %17 = tpu.matmul %15, %16, %cst_10 {dimension_numbers = #tpu.dot_dimension_numbers<[1], [0], [0], [1], [0, 0, 1, 1], [], []>} : vector<128x256xbf16>, vector<256x128xbf16>, vector<128x128xf32> -> vector<128x128xf32>
    %c0_11 = arith.constant 0 : index
    %c0_12 = arith.constant 0 : index
    %18 = vector.load %arg5[%c0_11, %c0_12] : memref<1x128xf32, #tpu.memory_space<vmem>>, vector<1x128xf32>
    %19 = vector.broadcast %18 : vector<1x128xf32> to vector<128x128xf32>
    %20 = arith.addf %17, %19 : vector<128x128xf32>
    %cst_13 = arith.constant 0.000000e+00 : f32
    %21 = vector.broadcast %cst_13 : f32 to vector<128x128xf32>
    %22 = arith.cmpf ogt, %20, %21 : vector<128x128xf32>
    %cst_14 = arith.constant 0.000000e+00 : f32
    %23 = vector.broadcast %cst_14 : f32 to vector<128x128xf32>
    %24 = arith.minimumf %20, %23 : vector<128x128xf32>
    %25 = math.exp %24 : vector<128x128xf32>
    %cst_15 = arith.constant 1.000000e+00 : f32
    %26 = vector.broadcast %cst_15 : f32 to vector<128x128xf32>
    %27 = arith.subf %25, %26 : vector<128x128xf32>
    %28 = arith.select %22, %20, %27 : vector<128x128xi1>, vector<128x128xf32>
    %29 = arith.truncf %28 : vector<128x128xf32> to vector<128x128xbf16>
    %c0_16 = arith.constant 0 : index
    %c0_17 = arith.constant 0 : index
    %30 = vector.load %arg6[%c0_16, %c0_17] : memref<128x128xbf16, #tpu.memory_space<vmem>>, vector<128x128xbf16>
    %cst_18 = arith.constant dense<0.000000e+00> : vector<128x128xf32>
    %31 = tpu.matmul %29, %30, %cst_18 {dimension_numbers = #tpu.dot_dimension_numbers<[1], [0], [0], [1], [0, 0, 1, 1], [], []>} : vector<128x128xbf16>, vector<128x128xbf16>, vector<128x128xf32> -> vector<128x128xf32>
    %c0_19 = arith.constant 0 : index
    %c0_20 = arith.constant 0 : index
    %32 = vector.load %arg7[%c0_19, %c0_20] : memref<1x128xf32, #tpu.memory_space<vmem>>, vector<1x128xf32>
    %33 = vector.broadcast %32 : vector<1x128xf32> to vector<128x128xf32>
    %34 = arith.addf %31, %33 : vector<128x128xf32>
    %cst_21 = arith.constant 0.000000e+00 : f32
    %35 = vector.broadcast %cst_21 : f32 to vector<128x128xf32>
    %36 = arith.cmpf ogt, %34, %35 : vector<128x128xf32>
    %cst_22 = arith.constant 0.000000e+00 : f32
    %37 = vector.broadcast %cst_22 : f32 to vector<128x128xf32>
    %38 = arith.minimumf %34, %37 : vector<128x128xf32>
    %39 = math.exp %38 : vector<128x128xf32>
    %cst_23 = arith.constant 1.000000e+00 : f32
    %40 = vector.broadcast %cst_23 : f32 to vector<128x128xf32>
    %41 = arith.subf %39, %40 : vector<128x128xf32>
    %42 = arith.select %36, %34, %41 : vector<128x128xi1>, vector<128x128xf32>
    %43 = arith.truncf %42 : vector<128x128xf32> to vector<128x128xbf16>
    %c0_24 = arith.constant 0 : index
    %c0_25 = arith.constant 0 : index
    %44 = vector.load %arg8[%c0_24, %c0_25] : memref<128x8xbf16, #tpu.memory_space<vmem>>, vector<128x8xbf16>
    %cst_26 = arith.constant dense<0.000000e+00> : vector<128x8xf32>
    %45 = tpu.matmul %43, %44, %cst_26 {dimension_numbers = #tpu.dot_dimension_numbers<[1], [0], [0], [1], [0, 0, 1, 1], [], []>} : vector<128x128xbf16>, vector<128x8xbf16>, vector<128x8xf32> -> vector<128x8xf32>
    %c0_27 = arith.constant 0 : index
    %c0_28 = arith.constant 0 : index
    %46 = vector.load %arg9[%c0_27, %c0_28] : memref<1x8xf32, #tpu.memory_space<vmem>>, vector<1x8xf32>
    %47 = vector.broadcast %46 : vector<1x8xf32> to vector<128x8xf32>
    %48 = arith.addf %45, %47 : vector<128x8xf32>
    %49 = tpu.iota {dimensions = array<i32: 1>} : vector<128x8xi32>
    %c0_i32 = arith.constant 0 : i32
    %50 = vector.broadcast %c0_i32 : i32 to vector<128x8xi32>
    %51 = arith.cmpi eq, %49, %50 : vector<128x8xi32>
    %cst_29 = arith.constant 0.000000e+00 : f32
    %52 = vector.broadcast %cst_29 : f32 to vector<128x8xf32>
    %53 = arith.subf %52, %48 : vector<128x8xf32>
    %54 = math.exp %53 : vector<128x8xf32>
    %cst_30 = arith.constant 1.000000e+00 : f32
    %55 = vector.broadcast %cst_30 : f32 to vector<128x8xf32>
    %56 = arith.addf %55, %54 : vector<128x8xf32>
    %cst_31 = arith.constant 1.000000e+00 : f32
    %57 = vector.broadcast %cst_31 : f32 to vector<128x8xf32>
    %58 = arith.divf %57, %56 : vector<128x8xf32>
    %59 = arith.select %51, %58, %48 : vector<128x8xi1>, vector<128x8xf32>
    %c0_32 = arith.constant 0 : index
    %c0_33 = arith.constant 0 : index
    %60 = vector.load %arg10[%c0_32, %c0_33] : memref<128x8xf32, #tpu.memory_space<vmem>>, vector<128x8xf32>
    tpu.vector_store %arg10[%c0_32, %c0_33], %59 {strides = array<i32>} : memref<128x8xf32, #tpu.memory_space<vmem>>, vector<128x8xf32>,
    return
  }
  func.func @transform_0(%arg0: i32) -> (i32, i32) {
    %c0_i32 = arith.constant 0 : i32
    %c0_i32_0 = arith.constant 0 : i32
    return %arg0, %c0_i32 : i32, i32
  }
  func.func @transform_1(%arg0: i32) -> (i32, i32) {
    %c0_i32 = arith.constant 0 : i32
    %c0_i32_0 = arith.constant 0 : i32
    %c0_i32_1 = arith.constant 0 : i32
    return %c0_i32, %c0_i32_0 : i32, i32
  }
  func.func @transform_2(%arg0: i32) -> (i32, i32) {
    %c0_i32 = arith.constant 0 : i32
    %c0_i32_0 = arith.constant 0 : i32
    %c0_i32_1 = arith.constant 0 : i32
    return %c0_i32, %c0_i32_0 : i32, i32
  }
  func.func @transform_3(%arg0: i32) -> (i32, i32) {
    %c0_i32 = arith.constant 0 : i32
    %c0_i32_0 = arith.constant 0 : i32
    %c0_i32_1 = arith.constant 0 : i32
    return %c0_i32, %c0_i32_0 : i32, i32
  }
  func.func @transform_4(%arg0: i32) -> (i32, i32) {
    %c0_i32 = arith.constant 0 : i32
    %c0_i32_0 = arith.constant 0 : i32
    %c0_i32_1 = arith.constant 0 : i32
    return %c0_i32, %c0_i32_0 : i32, i32
  }
  func.func @transform_5(%arg0: i32) -> (i32, i32) {
    %c0_i32 = arith.constant 0 : i32
    %c0_i32_0 = arith.constant 0 : i32
    %c0_i32_1 = arith.constant 0 : i32
    return %c0_i32, %c0_i32_0 : i32, i32
  }
  func.func @transform_6(%arg0: i32) -> (i32, i32) {
    %c0_i32 = arith.constant 0 : i32
    %c0_i32_0 = arith.constant 0 : i32
    %c0_i32_1 = arith.constant 0 : i32
    return %c0_i32, %c0_i32_0 : i32, i32
  }
  func.func @transform_7(%arg0: i32) -> (i32, i32) {
    %c0_i32 = arith.constant 0 : i32
    %c0_i32_0 = arith.constant 0 : i32
    %c0_i32_1 = arith.constant 0 : i32
    return %c0_i32, %c0_i32_0 : i32, i32
  }
  func.func @transform_8(%arg0: i32) -> (i32, i32) {
    %c0_i32 = arith.constant 0 : i32
    %c0_i32_0 = arith.constant 0 : i32
    %c0_i32_1 = arith.constant 0 : i32
    return %c0_i32, %c0_i32_0 : i32, i32
  }
  func.func @transform_9(%arg0: i32) -> (i32, i32) {
    %c0_i32 = arith.constant 0 : i32
    %c0_i32_0 = arith.constant 0 : i32
    return %arg0, %c0_i32 : i32, i32
  }
}

</mosaic_0001>

<llo_original>
// kernel: dragonnet_forward.1
$region0: #{dragonnet_forward.1}
  #allocation0 [shape = 'u32[]', space=smem, size = 0x4, offset = 0x4, fixed_abs, tag = 'smem constant byte address 0x4 - core index']
  #allocation1 [shape = 'u32[144,128]{1,0:T(1,128)}', space=vmem, size = 0x12000, scoped, tag = 'internal scratch']
  %s0 = inlined_call_operand.vmem [shape: f32[256,16], index: 0, kind: input, shape index: {}]
  %s1 = inlined_call_operand.vmem [shape: bf16[16,256], index: 1, kind: input, shape index: {}]
  %s2 = inlined_call_operand.vmem [shape: f32[1,256], index: 2, kind: input, shape index: {}]
  %s3 = inlined_call_operand.vmem [shape: bf16[256,128], index: 3, kind: input, shape index: {}]
  %s4 = inlined_call_operand.vmem [shape: f32[1,128], index: 4, kind: input, shape index: {}]
  %s5 = inlined_call_operand.vmem [shape: bf16[128,128], index: 5, kind: input, shape index: {}]
  %s6 = inlined_call_operand.vmem [shape: f32[1,128], index: 6, kind: input, shape index: {}]
  %s7 = inlined_call_operand.vmem [shape: bf16[128,8], index: 7, kind: input, shape index: {}]
  %s8 = inlined_call_operand.vmem [shape: f32[1,8], index: 8, kind: input, shape index: {}]
  %s9 = inlined_call_operand.vmem [shape: f32[256,8], index: 9, kind: output, shape index: {}]
  %s10 = sld [smem:[#allocation0]]
  $region69: #{dragonnet_forward.1} parent=0
    _
  %s12 = ssub.s32 1, %s10
  %s13 = scalar_select 0, %s12, %s10
  loop: start=0, step=1, limit=4
  $region2: #{dragonnet_forward.1} parent=0 // loop_pre_header
    _
  $region3: #{dragonnet_forward.1} parent=0 // loop_header
    %s15 = sphi 0, %s19
    %p16 = scmp.ge.s32.totalorder %s15, 4
    %s25 = sphi 0, %s27
    %s28 = sphi 0, %s25
    %s29 = sphi 0, %s28
    %s45 = sphi 0, %s29
    %s49 = sphi 0, %s49
    %s51 = sphi 0, %s49
    %s52 = sphi 0, %s51
    %s66 = sphi 0, %s52
    %s70 = sphi 0, %s70
    %s72 = sphi 0, %s70
    %s73 = sphi 0, %s72
    %s87 = sphi 0, %s73
    %s91 = sphi 0, %s91
    %s93 = sphi 0, %s91
    %s94 = sphi 0, %s93
    %s108 = sphi 0, %s94
    %s112 = sphi 0, %s112
    %s114 = sphi 0, %s112
    %s115 = sphi 0, %s114
    %s129 = sphi 0, %s115
    %s133 = sphi 0, %s133
    %s135 = sphi 0, %s133
    %s136 = sphi 0, %s135
    %s150 = sphi 0, %s136
    %s154 = sphi 0, %s154
    %s156 = sphi 0, %s154
    %s157 = sphi 0, %s156
    %s171 = sphi 0, %s157
    %s175 = sphi 0, %s175
    %s177 = sphi 0, %s175
    %s178 = sphi 0, %s177
    %s192 = sphi 0, %s178
    %s196 = sphi 0, %s196
    %s198 = sphi 0, %s196
    %s199 = sphi 0, %s198
    %s213 = sphi 0, %s199
    %s219 = sphi 0, %s221
    %s222 = sphi 0, %s219
    %s223 = sphi 0, %s222
    %s239 = sphi 0, %s223
  $region4: #{dragonnet_forward.1} parent=0 // loop_header_branch
    %18 = sbr.rel (%p16) target = $region8
  $region5: #{dragonnet_forward.1} parent=0 // loop_body
    %s20 = ssub.s32 %s15, 1
    %s21 = ssub.s32 %s15, 2
    %s22 = sadd.s32 %s15, 1
    %s23 = ssub.s32 %s15, %s22
    %p24 = scmp.eq.s32.totalorder %s23, 0
    %s26 = sadd.s32 %s25, 1
    %s27 = scalar_select %p24, %s25, %s26
    %p30 = pneg %p24
    %p31 = scmp.eq.s32.totalorder %s15, 1
    %p32 = por %p30, %p31
    %p33 = scmp.ne.s32.totalorder %s25, %s28
    %p34 = scmp.eq.s32.totalorder %s15, 0
    %p35 = por %p33, %p34
    %p36 = scmp.ne.s32.totalorder %s25, %s28
    %p37 = scmp.eq.s32.totalorder %s20, 1
    %p38 = por %p36, %p37
    %p39 = scmp.ne.s32.totalorder %s28, %s29
    %p40 = scmp.eq.s32.totalorder %s20, 0
    %p41 = por %p39, %p40
    %p42 = scmp.ne.s32.totalorder %s28, %s29
    %p43 = scmp.eq.s32.totalorder %s21, 1
    %p44 = por %p42, %p43
    %p46 = scmp.ne.s32.totalorder %s29, %s45
    %p47 = scmp.eq.s32.totalorder %s21, 0
    %p48 = por %p46, %p47
    %s50 = sadd.s32 %s49, 1
    %p53 = scmp.eq.s32.totalorder %s15, 1
    %p54 = scmp.ne.s32.totalorder %s49, %s51
    %p55 = scmp.eq.s32.totalorder %s15, 0
    %p56 = por %p54, %p55
    %p57 = scmp.ne.s32.totalorder %s49, %s51
    %p58 = scmp.eq.s32.totalorder %s20, 1
    %p59 = por %p57, %p58
    %p60 = scmp.ne.s32.totalorder %s51, %s52
    %p61 = scmp.eq.s32.totalorder %s20, 0
    %p62 = por %p60, %p61
    %p63 = scmp.ne.s32.totalorder %s51, %s52
    %p64 = scmp.eq.s32.totalorder %s21, 1
    %p65 = por %p63, %p64
    %p67 = scmp.ne.s32.totalorder %s52, %s66
    %p68 = scmp.eq.s32.totalorder %s21, 0
    %p69 = por %p67, %p68
    %s71 = sadd.s32 %s70, 1
    %p74 = scmp.eq.s32.totalorder %s15, 1
    %p75 = scmp.ne.s32.totalorder %s70, %s72
    %p76 = scmp.eq.s32.totalorder %s15, 0
    %p77 = por %p75, %p76
    %p78 = scmp.ne.s32.totalorder %s70, %s72
    %p79 = scmp.eq.s32.totalorder %s20, 1
    %p80 = por %p78, %p79
    %p81 = scmp.ne.s32.totalorder %s72, %s73
    %p82 = scmp.eq.s32.totalorder %s20, 0
    %p83 = por %p81, %p82
    %p84 = scmp.ne.s32.totalorder %s72, %s73
    %p85 = scmp.eq.s32.totalorder %s21, 1
    %p86 = por %p84, %p85
    %p88 = scmp.ne.s32.totalorder %s73, %s87
    %p89 = scmp.eq.s32.totalorder %s21, 0
    %p90 = por %p88, %p89
    %s92 = sadd.s32 %s91, 1
    %p95 = scmp.eq.s32.totalorder %s15, 1
    %p96 = scmp.ne.s32.totalorder %s91, %s93
    %p97 = scmp.eq.s32.totalorder %s15, 0
    %p98 = por %p96, %p97
    %p99 = scmp.ne.s32.totalorder %s91, %s93
    %p100 = scmp.eq.s32.totalorder %s20, 1
    %p101 = por %p99, %p100
    %p102 = scmp.ne.s32.totalorder %s93, %s94
    %p103 = scmp.eq.s32.totalorder %s20, 0
    %p104 = por %p102, %p103
    %p105 = scmp.ne.s32.totalorder %s93, %s94
    %p106 = scmp.eq.s32.totalorder %s21, 1
    %p107 = por %p105, %p106
    %p109 = scmp.ne.s32.totalorder %s94, %s108
    %p110 = scmp.eq.s32.totalorder %s21, 0
    %p111 = por %p109, %p110
    %s113 = sadd.s32 %s112, 1
    %p116 = scmp.eq.s32.totalorder %s15, 1
    %p117 = scmp.ne.s32.totalorder %s112, %s114
    %p118 = scmp.eq.s32.totalorder %s15, 0
    %p119 = por %p117, %p118
    %p120 = scmp.ne.s32.totalorder %s112, %s114
    %p121 = scmp.eq.s32.totalorder %s20, 1
    %p122 = por %p120, %p121
    %p123 = scmp.ne.s32.totalorder %s114, %s115
    %p124 = scmp.eq.s32.totalorder %s20, 0
    %p125 = por %p123, %p124
    %p126 = scmp.ne.s32.totalorder %s114, %s115
    %p127 = scmp.eq.s32.totalorder %s21, 1
    %p128 = por %p126, %p127
    %p130 = scmp.ne.s32.totalorder %s115, %s129
    %p131 = scmp.eq.s32.totalorder %s21, 0
    %p132 = por %p130, %p131
    %s134 = sadd.s32 %s133, 1
    %p137 = scmp.eq.s32.totalorder %s15, 1
    %p138 = scmp.ne.s32.totalorder %s133, %s135
    %p139 = scmp.eq.s32.totalorder %s15, 0
    %p140 = por %p138, %p139
    %p141 = scmp.ne.s32.totalorder %s133, %s135
    %p142 = scmp.eq.s32.totalorder %s20, 1
    %p143 = por %p141, %p142
    %p144 = scmp.ne.s32.totalorder %s135, %s136
    %p145 = scmp.eq.s32.totalorder %s20, 0
    %p146 = por %p144, %p145
    %p147 = scmp.ne.s32.totalorder %s135, %s136
    %p148 = scmp.eq.s32.totalorder %s21, 1
    %p149 = por %p147, %p148
    %p151 = scmp.ne.s32.totalorder %s136, %s150
    %p152 = scmp.eq.s32.totalorder %s21, 0
    %p153 = por %p151, %p152
    %s155 = sadd.s32 %s154, 1
    %p158 = scmp.eq.s32.totalorder %s15, 1
    %p159 = scmp.ne.s32.totalorder %s154, %s156
    %p160 = scmp.eq.s32.totalorder %s15, 0
    %p161 = por %p159, %p160
    %p162 = scmp.ne.s32.totalorder %s154, %s156
    %p163 = scmp.eq.s32.totalorder %s20, 1
    %p164 = por %p162, %p163
    %p165 = scmp.ne.s32.totalorder %s156, %s157
    %p166 = scmp.eq.s32.totalorder %s20, 0
    %p167 = por %p165, %p166
    %p168 = scmp.ne.s32.totalorder %s156, %s157
    %p169 = scmp.eq.s32.totalorder %s21, 1
    %p170 = por %p168, %p169
    %p172 = scmp.ne.s32.totalorder %s157, %s171
    %p173 = scmp.eq.s32.totalorder %s21, 0
    %p174 = por %p172, %p173
    %s176 = sadd.s32 %s175, 1
    %p179 = scmp.eq.s32.totalorder %s15, 1
    %p180 = scmp.ne.s32.totalorder %s175, %s177
    %p181 = scmp.eq.s32.totalorder %s15, 0
    %p182 = por %p180, %p181
    %p183 = scmp.ne.s32.totalorder %s175, %s177
    %p184 = scmp.eq.s32.totalorder %s20, 1
    %p185 = por %p183, %p184
    %p186 = scmp.ne.s32.totalorder %s177, %s178
    %p187 = scmp.eq.s32.totalorder %s20, 0
    %p188 = por %p186, %p187
    %p189 = scmp.ne.s32.totalorder %s177, %s178
    %p190 = scmp.eq.s32.totalorder %s21, 1
    %p191 = por %p189, %p190
    %p193 = scmp.ne.s32.totalorder %s178, %s192
    %p194 = scmp.eq.s32.totalorder %s21, 0
    %p195 = por %p193, %p194
    %s197 = sadd.s32 %s196, 1
    %p200 = scmp.eq.s32.totalorder %s15, 1
    %p201 = scmp.ne.s32.totalorder %s196, %s198
    %p202 = scmp.eq.s32.totalorder %s15, 0
    %p203 = por %p201, %p202
    %p204 = scmp.ne.s32.totalorder %s196, %s198
    %p205 = scmp.eq.s32.totalorder %s20, 1
    %p206 = por %p204, %p205
    %p207 = scmp.ne.s32.totalorder %s198, %s199
    %p208 = scmp.eq.s32.totalorder %s20, 0
    %p209 = por %p207, %p208
    %p210 = scmp.ne.s32.totalorder %s198, %s199
    %p211 = scmp.eq.s32.totalorder %s21, 1
    %p212 = por %p210, %p211
    %p214 = scmp.ne.s32.totalorder %s199, %s213
    %p215 = scmp.eq.s32.totalorder %s21, 0
    %p216 = por %p214, %p215
    %s217 = ssub.s32 %s15, %s22
    %p218 = scmp.eq.s32.totalorder %s217, 0
    %s220 = sadd.s32 %s219, 1
    %s221 = scalar_select %p218, %s219, %s220
    %p224 = pneg %p218
    %p225 = scmp.eq.s32.totalorder %s15, 1
    %p226 = por %p224, %p225
    %p227 = scmp.ne.s32.totalorder %s219, %s222
    %p228 = scmp.eq.s32.totalorder %s15, 0
    %p229 = por %p227, %p228
    %p230 = scmp.ne.s32.totalorder %s219, %s222
    %p231 = scmp.eq.s32.totalorder %s20, 1
    %p232 = por %p230, %p231
    %p233 = scmp.ne.s32.totalorder %s222, %s223
    %p234 = scmp.eq.s32.totalorder %s20, 0
    %p235 = por %p233, %p234
    %p236 = scmp.ne.s32.totalorder %s222, %s223
    %p237 = scmp.eq.s32.totalorder %s21, 1
    %p238 = por %p236, %p237
    %p240 = scmp.ne.s32.totalorder %s223, %s239
    %p241 = scmp.eq.s32.totalorder %s21, 0
    %p242 = por %p240, %p241
    %p243 = scmp.le.s32.totalorder 1, %s15
    %p244 = scmp.lt.s32.totalorder %s15, 3
    %p245 = pnand %p243, %p244
    %p246 = pneg %p245
    // Predicated region
    $region9: #{dragonnet_forward.1} parent=5 // pred_check
      _
    $region10: #{dragonnet_forward.1} parent=5 // pred_check_branch
      %248 = sbr.rel (%p245) target = $region12
    $region11: #{dragonnet_forward.1} parent=5 // pred_region
      %s249 = ssub.s32 %s15, 1
      // Predicated region
      $region13: #{dragonnet_forward.1} parent=11 // pred_check
        %p250 = pneg %p62
      $region14: #{dragonnet_forward.1} parent=11 // pred_check_branch
        %252 = sbr.rel (%p250) target = $region16
      $region15: #{dragonnet_forward.1} parent=11 // pred_region
        _
      $region16: #{dragonnet_forward.1} parent=11 // pred_fallthru
        _
      // Predicated region
      $region17: #{dragonnet_forward.1} parent=11 // pred_check
        %p253 = pneg %p83
      $region18: #{dragonnet_forward.1} parent=11 // pred_check_branch
        %255 = sbr.rel (%p253) target = $region20
      $region19: #{dragonnet_forward.1} parent=11 // pred_region
        _
      $region20: #{dragonnet_forward.1} parent=11 // pred_fallthru
        _
      // Predicated region
      $region21: #{dragonnet_forward.1} parent=11 // pred_check
        %p256 = pneg %p104
      $region22: #{dragonnet_forward.1} parent=11 // pred_check_branch
        %258 = sbr.rel (%p256) target = $region24
      $region23: #{dragonnet_forward.1} parent=11 // pred_region
        _
      $region24: #{dragonnet_forward.1} parent=11 // pred_fallthru
        _
      // Predicated region
      $region25: #{dragonnet_forward.1} parent=11 // pred_check
        %p259 = pneg %p125
      $region26: #{dragonnet_forward.1} parent=11 // pred_check_branch
        %261 = sbr.rel (%p259) target = $region28
      $region27: #{dragonnet_forward.1} parent=11 // pred_region
        _
      $region28: #{dragonnet_forward.1} parent=11 // pred_fallthru
        _
      // Predicated region
      $region29: #{dragonnet_forward.1} parent=11 // pred_check
        %p262 = pneg %p146
      $region30: #{dragonnet_forward.1} parent=11 // pred_check_branch
        %264 = sbr.rel (%p262) target = $region32
      $region31: #{dragonnet_forward.1} parent=11 // pred_region
        _
      $region32: #{dragonnet_forward.1} parent=11 // pred_fallthru
        _
      // Predicated region
      $region33: #{dragonnet_forward.1} parent=11 // pred_check
        %p265 = pneg %p167
      $region34: #{dragonnet_forward.1} parent=11 // pred_check_branch
        %267 = sbr.rel (%p265) target = $region36
      $region35: #{dragonnet_forward.1} parent=11 // pred_region
        _
      $region36: #{dragonnet_forward.1} parent=11 // pred_fallthru
        _
      // Predicated region
      $region37: #{dragonnet_forward.1} parent=11 // pred_check
        %p268 = pneg %p188
      $region38: #{dragonnet_forward.1} parent=11 // pred_check_branch
        %270 = sbr.rel (%p268) target = $region40
      $region39: #{dragonnet_forward.1} parent=11 // pred_region
        _
      $region40: #{dragonnet_forward.1} parent=11 // pred_fallthru
        _
      // Predicated region
      $region41: #{dragonnet_forward.1} parent=11 // pred_check
        %p271 = pneg %p209
      $region42: #{dragonnet_forward.1} parent=11 // pred_check_branch
        %273 = sbr.rel (%p271) target = $region44
      $region43: #{dragonnet_forward.1} parent=11 // pred_region
        _
      $region44: #{dragonnet_forward.1} parent=11 // pred_fallthru
        _
    $region12: #{dragonnet_forward.1} parent=5 // pred_fallthru
      _
    %p274 = scmp.lt.s32.totalorder %s15, 2
    // Predicated region
    $region45: #{dragonnet_forward.1} parent=5 // pred_check
      %p275 = pneg %p274
    $region46: #{dragonnet_forward.1} parent=5 // pred_check_branch
      %277 = sbr.rel (%p275) target = $region48
    $region47: #{dragonnet_forward.1} parent=5 // pred_region
      // Predicated region
      $region49: #{dragonnet_forward.1} parent=47 // pred_check
        %p278 = pneg %p35
      $region50: #{dragonnet_forward.1} parent=47 // pred_check_branch
        %280 = sbr.rel (%p278) target = $region52
      $region51: #{dragonnet_forward.1} parent=47 // pred_region
        %s281 = smul.u32 16, %s15
        %p282 = scmp.lt.s32.totalorder %s281, 31
        %s283 = scalar_select %p282, %s281, 31
        %s284 = smul.addr %s283, 8
        %s285 = scalar_lea.vmem %s0, %s284
        %s286 = smul.u32 16, %s15
      $region52: #{dragonnet_forward.1} parent=47 // pred_fallthru
        _
    $region48: #{dragonnet_forward.1} parent=5 // pred_fallthru
      _
    %p287 = scmp.le.s32.totalorder 1, %s15
    %p288 = scmp.lt.s32.totalorder %s15, 3
    %p289 = pnand %p287, %p288
    %p290 = pneg %p289
    // Predicated region
    $region53: #{dragonnet_forward.1} parent=5 // pred_check
      _
    $region54: #{dragonnet_forward.1} parent=5 // pred_check_branch
      %292 = sbr.rel (%p289) target = $region56
    $region55: #{dragonnet_forward.1} parent=5 // pred_region
      %s293 = ssub.s32 %s15, 1
      %s294 = smul.u32 16, %s20
      %p295 = scmp.lt.s32.totalorder %s294, 31
      %s296 = scalar_select %p295, %s294, 31
      %s297 = smul.addr %s296, 8
      %s298 = scalar_lea.vmem %s0, %s297
      %p299 = pneg %p41
      %p300 = pneg %p38
      %p301 = pneg %p62
      %p302 = pneg %p59
      %p303 = pneg %p83
      %p304 = pneg %p80
      %p305 = pneg %p104
      %p306 = pneg %p101
      %p307 = pneg %p125
      %p308 = pneg %p122
      %p309 = pneg %p146
      %p310 = pneg %p143
      %p311 = pneg %p167
      %p312 = pneg %p164
      %p313 = pneg %p188
      %p314 = pneg %p185
      %p315 = pneg %p209
      %p316 = pneg %p206
      %p317 = pneg %p235
      %p318 = pneg %p232
      %s319 = smul.u32 16, %s20
      %p320 = scmp.lt.s32.totalorder %s319, 31
      %s321 = scalar_select %p320, %s319, 31
      %s322 = smul.addr %s321, 8
      %s323 = scalar_lea.vmem %s9, %s322
      %s324 = smul.u32 16, %s20
      %p325 = scmp.lt.s32.totalorder %s324, 31
      %s326 = scalar_select %p325, %s324, 31
      %s327 = smul.addr %s326, 8
      %s328 = scalar_lea.vmem %s0, %s327
      %s329 = smul.u32 16, %s20
      %s330 = smul.u32 16, %s20
      %p331 = scmp.lt.s32.totalorder %s330, 31
      %s332 = scalar_select %p331, %s330, 31
      %s333 = smul.addr %s332, 8
      %s334 = scalar_lea.vmem %s9, %s333
      %s335 = smul.u32 16, %s20
      %v337 = vld [vmem:[%s328] sm:$0xff]
      %v338 = vld [vmem:[%s328 + $0x8] sm:$0xff]
      %v339 = vld [vmem:[%s328 + $0x10] sm:$0xff]
      %v340 = vld [vmem:[%s328 + $0x18] sm:$0xff]
      %v341 = vld [vmem:[%s328 + $0x20] sm:$0xff]
      %v342 = vld [vmem:[%s328 + $0x28] sm:$0xff]
      %v343 = vld [vmem:[%s328 + $0x30] sm:$0xff]
      %v344 = vld [vmem:[%s328 + $0x38] sm:$0xff]
      %v345 = vld [vmem:[%s328 + $0x40] sm:$0xff]
      %v346 = vld [vmem:[%s328 + $0x48] sm:$0xff]
      %v347 = vld [vmem:[%s328 + $0x50] sm:$0xff]
      %v348 = vld [vmem:[%s328 + $0x58] sm:$0xff]
      %v349 = vld [vmem:[%s328 + $0x60] sm:$0xff]
      %v350 = vld [vmem:[%s328 + $0x68] sm:$0xff]
      %v351 = vld [vmem:[%s328 + $0x70] sm:$0xff]
      %v352 = vld [vmem:[%s328 + $0x78] sm:$0xff]
      %v353 = vpack.c.bf16 %v338, %v337
      %v354 = vpack.c.bf16 %v340, %v339
      %v355 = vpack.c.bf16 %v342, %v341
      %v356 = vpack.c.bf16 %v344, %v343
      %v357 = vpack.c.bf16 %v346, %v345
      %v358 = vpack.c.bf16 %v348, %v347
      %v359 = vpack.c.bf16 %v350, %v349
      %v360 = vpack.c.bf16 %v352, %v351
      %v361 = vld [vmem:[%s1] sm:$0xff]
      %v362 = vld [vmem:[%s1 + $0x8] sm:$0xff]
      %v363 = vld [vmem:[%s2] sm:$0x3]
      %v365 = vlaneseq
      %v366 = vshrl.u32 %v365, 7
      %v367 = vsub.s32 0, %v366
      %v368 = vrot.slane %v363, %v367
      %v369 = vlaneseq
      %v370 = vshrl.u32 %v369, 7
      %v371 = vsub.s32 1, %v370
      %v372 = vrot.slane %v363, %v371
      %v377 = vunpack.c.l.b16 %v361
      %v378 = vunpack.c.h.b16 %v361
      %v379 = vunpack.c.l.b16 %v362
      %v380 = vunpack.c.h.b16 %v362
      %v381 = vpack.c.b16 %v379, %v377
      %v382 = vpack.c.b16 %v380, %v378
      %vm385 = vcmask 130048
      %v387 = vsel %vm385, %v353, 0
      %v390 = vsel %vm385, %v354, 0
      %v393 = vsel %vm385, %v355, 0
      %v396 = vsel %vm385, %v356, 0
      %v399 = vsel %vm385, %v357, 0
      %v402 = vsel %vm385, %v358, 0
      %v405 = vsel %vm385, %v359, 0
      %v408 = vsel %vm385, %v360, 0
      %410 = vmatprep.subr.bf16.mxu0 %v382
      %411 = vmatpush1.bf16.msra.mxu0 %v381
      %412 = vmatprep.subr.bf16.mxu0 0
      %413 = vmatpush1.bf16.msra.mxu0 0
      %414 = vmatprep.subr.bf16.mxu0 0
      %415 = vmatpush1.bf16.msra.mxu0 0
      %416 = vmatprep.subr.bf16.mxu0 0
      %417 = vmatpush1.bf16.msra.mxu0 0
      %418 = vmatprep.subr.bf16.mxu0 0
      %419 = vmatpush1.bf16.msra.mxu0 0
      %420 = vmatprep.subr.bf16.mxu0 0
      %421 = vmatpush1.bf16.msra.mxu0 0
      %422 = vmatprep.subr.bf16.mxu0 0
      %423 = vmatpush1.bf16.msra.mxu0 0
      %424 = vmatprep.subr.bf16.mxu0 0
      %425 = vmatpush1.bf16.msra.mxu0 0
      %426 = vmatprep.subr.bf16.mxu0 0
      %427 = vmatpush1.bf16.msra.mxu0 0
      %428 = vmatprep.subr.bf16.mxu0 0
      %429 = vmatpush1.bf16.msra.mxu0 0
      %430 = vmatprep.subr.bf16.mxu0 0
      %431 = vmatpush1.bf16.msra.mxu0 0
      %432 = vmatprep.subr.bf16.mxu0 0
      %433 = vmatpush1.bf16.msra.mxu0 0
      %434 = vmatprep.subr.bf16.mxu0 0
      %435 = vmatpush1.bf16.msra.mxu0 0
      %436 = vmatprep.subr.bf16.mxu0 0
      %437 = vmatpush1.bf16.msra.mxu0 0
      %438 = vmatprep.subr.bf16.mxu0 0
      %439 = vmatpush1.bf16.msra.mxu0 0
      %440 = vmatprep.subr.bf16.mxu0 0
      %441 = vmatpush1.bf16.msra.mxu0 0
      %442 = vmatprep.mubr.bf16.mxu0 0
      %443 = vmatmul.mubr.bf16.gmra.mrb[0].mxu0 %v387
      %v444 = vpop.f32.mrb[0].mxu0
      %v445 = vadd.f32 %v368, %v444
      %v446 = vpop.f32.mrb[0].mxu0
      %v447 = vadd.f32 %v372, %v446
      %v448 = vpop.f32.mrb[0].mxu0
      %v449 = vadd.f32 %v368, %v448
      %v450 = vpop.f32.mrb[0].mxu0
      %v451 = vadd.f32 %v372, %v450
      %452 = vmatprep.mubr.bf16.mxu0 0
      %453 = vmatmul.mubr.bf16.gmra.mrb[0].mxu0 %v390
      %v454 = vpop.f32.mrb[0].mxu0
      %v455 = vadd.f32 %v368, %v454
      %v456 = vpop.f32.mrb[0].mxu0
      %v457 = vadd.f32 %v372, %v456
      %v458 = vpop.f32.mrb[0].mxu0
      %v459 = vadd.f32 %v368, %v458
      %v460 = vpop.f32.mrb[0].mxu0
      %v461 = vadd.f32 %v372, %v460
      %462 = vmatprep.mubr.bf16.mxu0 0
      %463 = vmatmul.mubr.bf16.gmra.mrb[0].mxu0 %v393
      %v464 = vpop.f32.mrb[0].mxu0
      %v465 = vadd.f32 %v368, %v464
      %v466 = vpop.f32.mrb[0].mxu0
      %v467 = vadd.f32 %v372, %v466
      %v468 = vpop.f32.mrb[0].mxu0
      %v469 = vadd.f32 %v368, %v468
      %v470 = vpop.f32.mrb[0].mxu0
      %v471 = vadd.f32 %v372, %v470
      %472 = vmatprep.mubr.bf16.mxu0 0
      %473 = vmatmul.mubr.bf16.gmra.mrb[0].mxu0 %v396
      %v474 = vpop.f32.mrb[0].mxu0
      %v475 = vadd.f32 %v368, %v474
      %v476 = vpop.f32.mrb[0].mxu0
      %v477 = vadd.f32 %v372, %v476
      %v478 = vpop.f32.mrb[0].mxu0
      %v479 = vadd.f32 %v368, %v478
      %v480 = vpop.f32.mrb[0].mxu0
      %v481 = vadd.f32 %v372, %v480
      %482 = vmatprep.mubr.bf16.mxu0 0
      %483 = vmatmul.mubr.bf16.gmra.mrb[0].mxu0 %v399
      %v484 = vpop.f32.mrb[0].mxu0
      %v485 = vadd.f32 %v368, %v484
      %v486 = vpop.f32.mrb[0].mxu0
      %v487 = vadd.f32 %v372, %v486
      %v488 = vpop.f32.mrb[0].mxu0
      %v489 = vadd.f32 %v368, %v488
      %v490 = vpop.f32.mrb[0].mxu0
      %v491 = vadd.f32 %v372, %v490
      %492 = vmatprep.mubr.bf16.mxu0 0
      %493 = vmatmul.mubr.bf16.gmra.mrb[0].mxu0 %v402
      %v494 = vpop.f32.mrb[0].mxu0
      %v495 = vadd.f32 %v368, %v494
      %v496 = vpop.f32.mrb[0].mxu0
      %v497 = vadd.f32 %v372, %v496
      %v498 = vpop.f32.mrb[0].mxu0
      %v499 = vadd.f32 %v368, %v498
      %v500 = vpop.f32.mrb[0].mxu0
      %v501 = vadd.f32 %v372, %v500
      %502 = vmatprep.mubr.bf16.mxu0 0
      %503 = vmatmul.mubr.bf16.gmra.mrb[0].mxu0 %v405
      %v504 = vpop.f32.mrb[0].mxu0
      %v505 = vadd.f32 %v368, %v504
      %v506 = vpop.f32.mrb[0].mxu0
      %v507 = vadd.f32 %v372, %v506
      %v508 = vpop.f32.mrb[0].mxu0
      %v509 = vadd.f32 %v368, %v508
      %v510 = vpop.f32.mrb[0].mxu0
      %v511 = vadd.f32 %v372, %v510
      %512 = vmatprep.mubr.bf16.mxu0 0
      %513 = vmatmul.mubr.bf16.gmra.mrb[0].mxu0 %v408
      %v514 = vpop.f32.mrb[0].mxu0
      %v515 = vadd.f32 %v368, %v514
      %v516 = vpop.f32.mrb[0].mxu0
      %v517 = vadd.f32 %v372, %v516
      %v518 = vpop.f32.mrb[0].mxu0
      %v519 = vadd.f32 %v368, %v518
      %v520 = vpop.f32.mrb[0].mxu0
      %v521 = vadd.f32 %v372, %v520
      %522 = vdwg.mxu0
      %vm523 = vcmp.gt.f32.partialorder %v445, 0.0
      %vm524 = vcmp.gt.f32.partialorder %v447, 0.0
      %vm525 = vcmp.gt.f32.partialorder %v449, 0.0
      %vm526 = vcmp.gt.f32.partialorder %v451, 0.0
      %vm527 = vcmp.gt.f32.partialorder %v455, 0.0
      %vm528 = vcmp.gt.f32.partialorder %v457, 0.0
      %vm529 = vcmp.gt.f32.partialorder %v459, 0.0
      %vm530 = vcmp.gt.f32.partialorder %v461, 0.0
      %vm531 = vcmp.gt.f32.partialorder %v465, 0.0
      %vm532 = vcmp.gt.f32.partialorder %v467, 0.0
      %vm533 = vcmp.gt.f32.partialorder %v469, 0.0
      %vm534 = vcmp.gt.f32.partialorder %v471, 0.0
      %vm535 = vcmp.gt.f32.partialorder %v475, 0.0
      %vm536 = vcmp.gt.f32.partialorder %v477, 0.0
      %vm537 = vcmp.gt.f32.partialorder %v479, 0.0
      %vm538 = vcmp.gt.f32.partialorder %v481, 0.0
      %vm539 = vcmp.gt.f32.partialorder %v485, 0.0
      %vm540 = vcmp.gt.f32.partialorder %v487, 0.0
      %vm541 = vcmp.gt.f32.partialorder %v489, 0.0
      %vm542 = vcmp.gt.f32.partialorder %v491, 0.0
      %vm543 = vcmp.gt.f32.partialorder %v495, 0.0
      %vm544 = vcmp.gt.f32.partialorder %v497, 0.0
      %vm545 = vcmp.gt.f32.partialorder %v499, 0.0
      %vm546 = vcmp.gt.f32.partialorder %v501, 0.0
      %vm547 = vcmp.gt.f32.partialorder %v505, 0.0
      %vm548 = vcmp.gt.f32.partialorder %v507, 0.0
      %vm549 = vcmp.gt.f32.partialorder %v509, 0.0
      %vm550 = vcmp.gt.f32.partialorder %v511, 0.0
      %vm551 = vcmp.gt.f32.partialorder %v515, 0.0
      %vm552 = vcmp.gt.f32.partialorder %v517, 0.0
      %vm553 = vcmp.gt.f32.partialorder %v519, 0.0
      %vm554 = vcmp.gt.f32.partialorder %v521, 0.0
      %v555 = vmin.f32 %v445, 0.0
      %v556 = vmin.f32 %v447, 0.0
      %v557 = vmin.f32 %v449, 0.0
      %v558 = vmin.f32 %v451, 0.0
      %v559 = vmin.f32 %v455, 0.0
      %v560 = vmin.f32 %v457, 0.0
      %v561 = vmin.f32 %v459, 0.0
      %v562 = vmin.f32 %v461, 0.0
      %v563 = vmin.f32 %v465, 0.0
      %v564 = vmin.f32 %v467, 0.0
      %v565 = vmin.f32 %v469, 0.0
      %v566 = vmin.f32 %v471, 0.0
      %v567 = vmin.f32 %v475, 0.0
      %v568 = vmin.f32 %v477, 0.0
      %v569 = vmin.f32 %v479, 0.0
      %v570 = vmin.f32 %v481, 0.0
      %v571 = vmin.f32 %v485, 0.0
      %v572 = vmin.f32 %v487, 0.0
      %v573 = vmin.f32 %v489, 0.0
      %v574 = vmin.f32 %v491, 0.0
      %v575 = vmin.f32 %v495, 0.0
      %v576 = vmin.f32 %v497, 0.0
      %v577 = vmin.f32 %v499, 0.0
      %v578 = vmin.f32 %v501, 0.0
      %v579 = vmin.f32 %v505, 0.0
      %v580 = vmin.f32 %v507, 0.0
      %v581 = vmin.f32 %v509, 0.0
      %v582 = vmin.f32 %v511, 0.0
      %v583 = vmin.f32 %v515, 0.0
      %v584 = vmin.f32 %v517, 0.0
      %v585 = vmin.f32 %v519, 0.0
      %v586 = vmin.f32 %v521, 0.0
      %v587 = vmul.f32 %v555, 1.442695
      %v588 = vpow.pop %v587
      %v589 = vmul.f32 %v556, 1.442695
      %v590 = vpow.pop %v589
      %v591 = vmul.f32 %v557, 1.442695
      %v592 = vpow.pop %v591
      %v593 = vmul.f32 %v558, 1.442695
      %v594 = vpow.pop %v593
      %v595 = vmul.f32 %v559, 1.442695
      %v596 = vpow.pop %v595
      %v597 = vmul.f32 %v560, 1.442695
      %v598 = vpow.pop %v597
      %v599 = vmul.f32 %v561, 1.442695
      %v600 = vpow.pop %v599
      %v601 = vmul.f32 %v562, 1.442695
      %v602 = vpow.pop %v601
      %v603 = vmul.f32 %v563, 1.442695
      %v604 = vpow.pop %v603
      %v605 = vmul.f32 %v564, 1.442695
      %v606 = vpow.pop %v605
      %v607 = vmul.f32 %v565, 1.442695
      %v608 = vpow.pop %v607
      %v609 = vmul.f32 %v566, 1.442695
      %v610 = vpow.pop %v609
      %v611 = vmul.f32 %v567, 1.442695
      %v612 = vpow.pop %v611
      %v613 = vmul.f32 %v568, 1.442695
      %v614 = vpow.pop %v613
      %v615 = vmul.f32 %v569, 1.442695
      %v616 = vpow.pop %v615
      %v617 = vmul.f32 %v570, 1.442695
      %v618 = vpow.pop %v617
      %v619 = vmul.f32 %v571, 1.442695
      %v620 = vpow.pop %v619
      %v621 = vmul.f32 %v572, 1.442695
      %v622 = vpow.pop %v621
      %v623 = vmul.f32 %v573, 1.442695
      %v624 = vpow.pop %v623
      %v625 = vmul.f32 %v574, 1.442695
      %v626 = vpow.pop %v625
      %v627 = vmul.f32 %v575, 1.442695
      %v628 = vpow.pop %v627
      %v629 = vmul.f32 %v576, 1.442695
      %v630 = vpow.pop %v629
      %v631 = vmul.f32 %v577, 1.442695
      %v632 = vpow.pop %v631
      %v633 = vmul.f32 %v578, 1.442695
      %v634 = vpow.pop %v633
      %v635 = vmul.f32 %v579, 1.442695
      %v636 = vpow.pop %v635
      %v637 = vmul.f32 %v580, 1.442695
      %v638 = vpow.pop %v637
      %v639 = vmul.f32 %v581, 1.442695
      %v640 = vpow.pop %v639
      %v641 = vmul.f32 %v582, 1.442695
      %v642 = vpow.pop %v641
      %v643 = vmul.f32 %v583, 1.442695
      %v644 = vpow.pop %v643
      %v645 = vmul.f32 %v584, 1.442695
      %v646 = vpow.pop %v645
      %v647 = vmul.f32 %v585, 1.442695
      %v648 = vpow.pop %v647
      %v649 = vmul.f32 %v586, 1.442695
      %v650 = vpow.pop %v649
      %v651 = vsub.f32 %v588, 1.0
      %v652 = vsub.f32 %v590, 1.0
      %v653 = vsub.f32 %v592, 1.0
      %v654 = vsub.f32 %v594, 1.0
      %v655 = vsub.f32 %v596, 1.0
      %v656 = vsub.f32 %v598, 1.0
      %v657 = vsub.f32 %v600, 1.0
      %v658 = vsub.f32 %v602, 1.0
      %v659 = vsub.f32 %v604, 1.0
      %v660 = vsub.f32 %v606, 1.0
      %v661 = vsub.f32 %v608, 1.0
      %v662 = vsub.f32 %v610, 1.0
      %v663 = vsub.f32 %v612, 1.0
      %v664 = vsub.f32 %v614, 1.0
      %v665 = vsub.f32 %v616, 1.0
      %v666 = vsub.f32 %v618, 1.0
      %v667 = vsub.f32 %v620, 1.0
      %v668 = vsub.f32 %v622, 1.0
      %v669 = vsub.f32 %v624, 1.0
      %v670 = vsub.f32 %v626, 1.0
      %v671 = vsub.f32 %v628, 1.0
      %v672 = vsub.f32 %v630, 1.0
      %v673 = vsub.f32 %v632, 1.0
      %v674 = vsub.f32 %v634, 1.0
      %v675 = vsub.f32 %v636, 1.0
      %v676 = vsub.f32 %v638, 1.0
      %v677 = vsub.f32 %v640, 1.0
      %v678 = vsub.f32 %v642, 1.0
      %v679 = vsub.f32 %v644, 1.0
      %v680 = vsub.f32 %v646, 1.0
      %v681 = vsub.f32 %v648, 1.0
      %v682 = vsub.f32 %v650, 1.0
      %v683 = vsel %vm523, %v445, %v651
      %v684 = vsel %vm524, %v447, %v652
      %v685 = vsel %vm525, %v449, %v653
      %v686 = vsel %vm526, %v451, %v654
      %v687 = vsel %vm527, %v455, %v655
      %v688 = vsel %vm528, %v457, %v656
      %v689 = vsel %vm529, %v459, %v657
      %v690 = vsel %vm530, %v461, %v658
      %v691 = vsel %vm531, %v465, %v659
      %v692 = vsel %vm532, %v467, %v660
      %v693 = vsel %vm533, %v469, %v661
      %v694 = vsel %vm534, %v471, %v662
      %v695 = vsel %vm535, %v475, %v663
      %v696 = vsel %vm536, %v477, %v664
      %v697 = vsel %vm537, %v479, %v665
      %v698 = vsel %vm538, %v481, %v666
      %v699 = vsel %vm539, %v485, %v667
      %v700 = vsel %vm540, %v487, %v668
      %v701 = vsel %vm541, %v489, %v669
      %v702 = vsel %vm542, %v491, %v670
      %v703 = vsel %vm543, %v495, %v671
      %v704 = vsel %vm544, %v497, %v672
      %v705 = vsel %vm545, %v499, %v673
      %v706 = vsel %vm546, %v501, %v674
      %v707 = vsel %vm547, %v505, %v675
      %v708 = vsel %vm548, %v507, %v676
      %v709 = vsel %vm549, %v509, %v677
      %v710 = vsel %vm550, %v511, %v678
      %v711 = vsel %vm551, %v515, %v679
      %v712 = vsel %vm552, %v517, %v680
      %v713 = vsel %vm553, %v519, %v681
      %v714 = vsel %vm554, %v521, %v682
      %v715 = vpack.c.bf16 %v685, %v683
      %v716 = vpack.c.bf16 %v686, %v684
      %v717 = vpack.c.bf16 %v689, %v687
      %v718 = vpack.c.bf16 %v690, %v688
      %v719 = vpack.c.bf16 %v693, %v691
      %v720 = vpack.c.bf16 %v694, %v692
      %v721 = vpack.c.bf16 %v697, %v695
      %v722 = vpack.c.bf16 %v698, %v696
      %v723 = vpack.c.bf16 %v701, %v699
      %v724 = vpack.c.bf16 %v702, %v700
      %v725 = vpack.c.bf16 %v705, %v703
      %v726 = vpack.c.bf16 %v706, %v704
      %v727 = vpack.c.bf16 %v709, %v707
      %v728 = vpack.c.bf16 %v710, %v708
      %v729 = vpack.c.bf16 %v713, %v711
      %v730 = vpack.c.bf16 %v714, %v712
      %v731 = vld [vmem:[%s3] sm:$0xf]
      %v732 = vld [vmem:[%s3 + $0x4] sm:$0xf]
      %v733 = vld [vmem:[%s3 + $0x8] sm:$0xf]
      %v734 = vld [vmem:[%s3 + $0xc] sm:$0xf]
      %v735 = vld [vmem:[%s3 + $0x10] sm:$0xf]
      %v736 = vld [vmem:[%s3 + $0x14] sm:$0xf]
      %v737 = vld [vmem:[%s3 + $0x18] sm:$0xf]
      %v738 = vld [vmem:[%s3 + $0x1c] sm:$0xf]
      %v739 = vld [vmem:[%s3 + $0x20] sm:$0xf]
      %v740 = vld [vmem:[%s3 + $0x24] sm:$0xf]
      %v741 = vld [vmem:[%s3 + $0x28] sm:$0xf]
      %v742 = vld [vmem:[%s3 + $0x2c] sm:$0xf]
      %v743 = vld [vmem:[%s3 + $0x30] sm:$0xf]
      %v744 = vld [vmem:[%s3 + $0x34] sm:$0xf]
      %v745 = vld [vmem:[%s3 + $0x38] sm:$0xf]
      %v746 = vld [vmem:[%s3 + $0x3c] sm:$0xf]
      %v747 = vld [vmem:[%s3 + $0x40] sm:$0xf]
      %v748 = vld [vmem:[%s3 + $0x44] sm:$0xf]
      %v749 = vld [vmem:[%s3 + $0x48] sm:$0xf]
      %v750 = vld [vmem:[%s3 + $0x4c] sm:$0xf]
      %v751 = vld [vmem:[%s3 + $0x50] sm:$0xf]
      %v752 = vld [vmem:[%s3 + $0x54] sm:$0xf]
      %v753 = vld [vmem:[%s3 + $0x58] sm:$0xf]
      %v754 = vld [vmem:[%s3 + $0x5c] sm:$0xf]
      %v755 = vld [vmem:[%s3 + $0x60] sm:$0xf]
      %v756 = vld [vmem:[%s3 + $0x64] sm:$0xf]
      %v757 = vld [vmem:[%s3 + $0x68] sm:$0xf]
      %v758 = vld [vmem:[%s3 + $0x6c] sm:$0xf]
      %v759 = vld [vmem:[%s3 + $0x70] sm:$0xf]
      %v760 = vld [vmem:[%s3 + $0x74] sm:$0xf]
      %v761 = vld [vmem:[%s3 + $0x78] sm:$0xf]
      %v762 = vld [vmem:[%s3 + $0x7c] sm:$0xf]
      %v763 = vld [vmem:[%s4] sm:$0x1]
      %v765 = vlaneseq
      %v766 = vshrl.u32 %v765, 7
      %v767 = vsub.s32 0, %v766
      %v768 = vrot.slane %v763, %v767
      %v802 = vunpack.c.l.b16 %v731
      %v803 = vunpack.c.l.b16 %v732
      %v804 = vunpack.c.l.b16 %v733
      %v805 = vunpack.c.l.b16 %v734
      %v806 = vunpack.c.l.b16 %v735
      %v807 = vunpack.c.l.b16 %v736
      %v808 = vunpack.c.l.b16 %v737
      %v809 = vunpack.c.l.b16 %v738
      %v810 = vunpack.c.l.b16 %v739
      %v811 = vunpack.c.l.b16 %v740
      %v812 = vunpack.c.l.b16 %v741
      %v813 = vunpack.c.l.b16 %v742
      %v814 = vunpack.c.l.b16 %v743
      %v815 = vunpack.c.l.b16 %v744
      %v816 = vunpack.c.l.b16 %v745
      %v817 = vunpack.c.l.b16 %v746
      %v818 = vunpack.c.l.b16 %v747
      %v819 = vunpack.c.l.b16 %v748
      %v820 = vunpack.c.l.b16 %v749
      %v821 = vunpack.c.l.b16 %v750
      %v822 = vunpack.c.l.b16 %v751
      %v823 = vunpack.c.l.b16 %v752
      %v824 = vunpack.c.l.b16 %v753
      %v825 = vunpack.c.l.b16 %v754
      %v826 = vunpack.c.l.b16 %v755
      %v827 = vunpack.c.l.b16 %v756
      %v828 = vunpack.c.l.b16 %v757
      %v829 = vunpack.c.l.b16 %v758
      %v830 = vunpack.c.l.b16 %v759
      %v831 = vunpack.c.l.b16 %v760
      %v832 = vunpack.c.l.b16 %v761
      %v833 = vunpack.c.l.b16 %v762
      %v834 = vpack.c.b16 %v803, %v802
      %v835 = vpack.c.b16 %v805, %v804
      %v836 = vpack.c.b16 %v807, %v806
      %v837 = vpack.c.b16 %v809, %v808
      %v838 = vpack.c.b16 %v811, %v810
      %v839 = vpack.c.b16 %v813, %v812
      %v840 = vpack.c.b16 %v815, %v814
      %v841 = vpack.c.b16 %v817, %v816
      %v842 = vpack.c.b16 %v819, %v818
      %v843 = vpack.c.b16 %v821, %v820
      %v844 = vpack.c.b16 %v823, %v822
      %v845 = vpack.c.b16 %v825, %v824
      %v846 = vpack.c.b16 %v827, %v826
      %v847 = vpack.c.b16 %v829, %v828
      %v848 = vpack.c.b16 %v831, %v830
      %v849 = vpack.c.b16 %v833, %v832
      %866 = vmatprep.subr.bf16.mxu0 0
      %867 = vmatpush1.bf16.msra.mxu0 %v834
      %868 = vmatprep.subr.bf16.mxu0 0
      %869 = vmatpush1.bf16.msra.mxu0 %v835
      %870 = vmatprep.subr.bf16.mxu0 0
      %871 = vmatpush1.bf16.msra.mxu0 %v836
      %872 = vmatprep.subr.bf16.mxu0 0
      %873 = vmatpush1.bf16.msra.mxu0 %v837
      %874 = vmatprep.subr.bf16.mxu0 0
      %875 = vmatpush1.bf16.msra.mxu0 %v838
      %876 = vmatprep.subr.bf16.mxu0 0
      %877 = vmatpush1.bf16.msra.mxu0 %v839
      %878 = vmatprep.subr.bf16.mxu0 0
      %879 = vmatpush1.bf16.msra.mxu0 %v840
      %880 = vmatprep.subr.bf16.mxu0 0
      %881 = vmatpush1.bf16.msra.mxu0 %v841
      %882 = vmatprep.subr.bf16.mxu0 0
      %883 = vmatpush1.bf16.msra.mxu0 %v842
      %884 = vmatprep.subr.bf16.mxu0 0
      %885 = vmatpush1.bf16.msra.mxu0 %v843
      %886 = vmatprep.subr.bf16.mxu0 0
      %887 = vmatpush1.bf16.msra.mxu0 %v844
      %888 = vmatprep.subr.bf16.mxu0 0
      %889 = vmatpush1.bf16.msra.mxu0 %v845
      %890 = vmatprep.subr.bf16.mxu0 0
      %891 = vmatpush1.bf16.msra.mxu0 %v846
      %892 = vmatprep.subr.bf16.mxu0 0
      %893 = vmatpush1.bf16.msra.mxu0 %v847
      %894 = vmatprep.subr.bf16.mxu0 0
      %895 = vmatpush1.bf16.msra.mxu0 %v848
      %896 = vmatprep.subr.bf16.mxu0 0
      %897 = vmatpush1.bf16.msra.mxu0 %v849
      %898 = vmatprep.mubr.bf16.mxu0 %v716
      %899 = vmatmul.mubr.bf16.gmra.mrb[0].mxu0 %v715
      %v900 = vpop.f32.mrb[0].mxu0
      %v901 = vadd.f32 %v768, %v900
      %v902 = vpop.f32.mrb[0].mxu0
      %v903 = vpop.f32.mrb[0].mxu0
      %v904 = vadd.f32 %v768, %v903
      %v905 = vpop.f32.mrb[0].mxu0
      %906 = vmatprep.mubr.bf16.mxu0 %v718
      %907 = vmatmul.mubr.bf16.gmra.mrb[0].mxu0 %v717
      %v908 = vpop.f32.mrb[0].mxu0
      %v909 = vadd.f32 %v768, %v908
      %v910 = vpop.f32.mrb[0].mxu0
      %v911 = vpop.f32.mrb[0].mxu0
      %v912 = vadd.f32 %v768, %v911
      %v913 = vpop.f32.mrb[0].mxu0
      %914 = vmatprep.mubr.bf16.mxu0 %v720
      %915 = vmatmul.mubr.bf16.gmra.mrb[0].mxu0 %v719
      %v916 = vpop.f32.mrb[0].mxu0
      %v917 = vadd.f32 %v768, %v916
      %v918 = vpop.f32.mrb[0].mxu0
      %v919 = vpop.f32.mrb[0].mxu0
      %v920 = vadd.f32 %v768, %v919
      %v921 = vpop.f32.mrb[0].mxu0
      %922 = vmatprep.mubr.bf16.mxu0 %v722
      %923 = vmatmul.mubr.bf16.gmra.mrb[0].mxu0 %v721
      %v924 = vpop.f32.mrb[0].mxu0
      %v925 = vadd.f32 %v768, %v924
      %v926 = vpop.f32.mrb[0].mxu0
      %v927 = vpop.f32.mrb[0].mxu0
      %v928 = vadd.f32 %v768, %v927
      %v929 = vpop.f32.mrb[0].mxu0
      %930 = vmatprep.mubr.bf16.mxu0 %v724
      %931 = vmatmul.mubr.bf16.gmra.mrb[0].mxu0 %v723
      %v932 = vpop.f32.mrb[0].mxu0
      %v933 = vadd.f32 %v768, %v932
      %v934 = vpop.f32.mrb[0].mxu0
      %v935 = vpop.f32.mrb[0].mxu0
      %v936 = vadd.f32 %v768, %v935
      %v937 = vpop.f32.mrb[0].mxu0
      %938 = vmatprep.mubr.bf16.mxu0 %v726
      %939 = vmatmul.mubr.bf16.gmra.mrb[0].mxu0 %v725
      %v940 = vpop.f32.mrb[0].mxu0
      %v941 = vadd.f32 %v768, %v940
      %v942 = vpop.f32.mrb[0].mxu0
      %v943 = vpop.f32.mrb[0].mxu0
      %v944 = vadd.f32 %v768, %v943
      %v945 = vpop.f32.mrb[0].mxu0
      %946 = vmatprep.mubr.bf16.mxu0 %v728
      %947 = vmatmul.mubr.bf16.gmra.mrb[0].mxu0 %v727
      %v948 = vpop.f32.mrb[0].mxu0
      %v949 = vadd.f32 %v768, %v948
      %v950 = vpop.f32.mrb[0].mxu0
      %v951 = vpop.f32.mrb[0].mxu0
      %v952 = vadd.f32 %v768, %v951
      %v953 = vpop.f32.mrb[0].mxu0
      %954 = vmatprep.mubr.bf16.mxu0 %v730
      %955 = vmatmul.mubr.bf16.gmra.mrb[0].mxu0 %v729
      %v956 = vpop.f32.mrb[0].mxu0
      %v957 = vadd.f32 %v768, %v956
      %v958 = vpop.f32.mrb[0].mxu0
      %v959 = vpop.f32.mrb[0].mxu0
      %v960 = vadd.f32 %v768, %v959
      %v961 = vpop.f32.mrb[0].mxu0
      %962 = vdwg.mxu0
      %vm963 = vcmp.gt.f32.partialorder %v901, 0.0
      %vm964 = vcmp.gt.f32.partialorder %v904, 0.0
      %vm965 = vcmp.gt.f32.partialorder %v909, 0.0
      %vm966 = vcmp.gt.f32.partialorder %v912, 0.0
      %vm967 = vcmp.gt.f32.partialorder %v917, 0.0
      %vm968 = vcmp.gt.f32.partialorder %v920, 0.0
      %vm969 = vcmp.gt.f32.partialorder %v925, 0.0
      %vm970 = vcmp.gt.f32.partialorder %v928, 0.0
      %vm971 = vcmp.gt.f32.partialorder %v933, 0.0
      %vm972 = vcmp.gt.f32.partialorder %v936, 0.0
      %vm973 = vcmp.gt.f32.partialorder %v941, 0.0
      %vm974 = vcmp.gt.f32.partialorder %v944, 0.0
      %vm975 = vcmp.gt.f32.partialorder %v949, 0.0
      %vm976 = vcmp.gt.f32.partialorder %v952, 0.0
      %vm977 = vcmp.gt.f32.partialorder %v957, 0.0
      %vm978 = vcmp.gt.f32.partialorder %v960, 0.0
      %v979 = vmin.f32 %v901, 0.0
      %v980 = vmin.f32 %v904, 0.0
      %v981 = vmin.f32 %v909, 0.0
      %v982 = vmin.f32 %v912, 0.0
      %v983 = vmin.f32 %v917, 0.0
      %v984 = vmin.f32 %v920, 0.0
      %v985 = vmin.f32 %v925, 0.0
      %v986 = vmin.f32 %v928, 0.0
      %v987 = vmin.f32 %v933, 0.0
      %v988 = vmin.f32 %v936, 0.0
      %v989 = vmin.f32 %v941, 0.0
      %v990 = vmin.f32 %v944, 0.0
      %v991 = vmin.f32 %v949, 0.0
      %v992 = vmin.f32 %v952, 0.0
      %v993 = vmin.f32 %v957, 0.0
      %v994 = vmin.f32 %v960, 0.0
      %v995 = vmul.f32 %v979, 1.442695
      %v996 = vpow.pop %v995
      %v997 = vmul.f32 %v980, 1.442695
      %v998 = vpow.pop %v997
      %v999 = vmul.f32 %v981, 1.442695
      %v1000 = vpow.pop %v999
      %v1001 = vmul.f32 %v982, 1.442695
      %v1002 = vpow.pop %v1001
      %v1003 = vmul.f32 %v983, 1.442695
      %v1004 = vpow.pop %v1003
      %v1005 = vmul.f32 %v984, 1.442695
      %v1006 = vpow.pop %v1005
      %v1007 = vmul.f32 %v985, 1.442695
      %v1008 = vpow.pop %v1007
      %v1009 = vmul.f32 %v986, 1.442695
      %v1010 = vpow.pop %v1009
      %v1011 = vmul.f32 %v987, 1.442695
      %v1012 = vpow.pop %v1011
      %v1013 = vmul.f32 %v988, 1.442695
      %v1014 = vpow.pop %v1013
      %v1015 = vmul.f32 %v989, 1.442695
      %v1016 = vpow.pop %v1015
      %v1017 = vmul.f32 %v990, 1.442695
      %v1018 = vpow.pop %v1017
      %v1019 = vmul.f32 %v991, 1.442695
      %v1020 = vpow.pop %v1019
      %v1021 = vmul.f32 %v992, 1.442695
      %v1022 = vpow.pop %v1021
      %v1023 = vmul.f32 %v993, 1.442695
      %v1024 = vpow.pop %v1023
      %v1025 = vmul.f32 %v994, 1.442695
      %v1026 = vpow.pop %v1025
      %v1027 = vsub.f32 %v996, 1.0
      %v1028 = vsub.f32 %v998, 1.0
      %v1029 = vsub.f32 %v1000, 1.0
      %v1030 = vsub.f32 %v1002, 1.0
      %v1031 = vsub.f32 %v1004, 1.0
      %v1032 = vsub.f32 %v1006, 1.0
      %v1033 = vsub.f32 %v1008, 1.0
      %v1034 = vsub.f32 %v1010, 1.0
      %v1035 = vsub.f32 %v1012, 1.0
      %v1036 = vsub.f32 %v1014, 1.0
      %v1037 = vsub.f32 %v1016, 1.0
      %v1038 = vsub.f32 %v1018, 1.0
      %v1039 = vsub.f32 %v1020, 1.0
      %v1040 = vsub.f32 %v1022, 1.0
      %v1041 = vsub.f32 %v1024, 1.0
      %v1042 = vsub.f32 %v1026, 1.0
      %v1043 = vsel %vm963, %v901, %v1027
      %v1044 = vsel %vm964, %v904, %v1028
      %v1045 = vsel %vm965, %v909, %v1029
      %v1046 = vsel %vm966, %v912, %v1030
      %v1047 = vsel %vm967, %v917, %v1031
      %v1048 = vsel %vm968, %v920, %v1032
      %v1049 = vsel %vm969, %v925, %v1033
      %v1050 = vsel %vm970, %v928, %v1034
      %v1051 = vsel %vm971, %v933, %v1035
      %v1052 = vsel %vm972, %v936, %v1036
      %v1053 = vsel %vm973, %v941, %v1037
      %v1054 = vsel %vm974, %v944, %v1038
      %v1055 = vsel %vm975, %v949, %v1039
      %v1056 = vsel %vm976, %v952, %v1040
      %v1057 = vsel %vm977, %v957, %v1041
      %v1058 = vsel %vm978, %v960, %v1042
      %v1059 = vpack.c.bf16 %v1044, %v1043
      %v1060 = vpack.c.bf16 %v1046, %v1045
      %v1061 = vpack.c.bf16 %v1048, %v1047
      %v1062 = vpack.c.bf16 %v1050, %v1049
      %v1063 = vpack.c.bf16 %v1052, %v1051
      %v1064 = vpack.c.bf16 %v1054, %v1053
      %v1065 = vpack.c.bf16 %v1056, %v1055
      %v1066 = vpack.c.bf16 %v1058, %v1057
      %v1067 = vld [vmem:[%s5] sm:$0xf]
      %v1068 = vld [vmem:[%s5 + $0x4] sm:$0xf]
      %v1069 = vld [vmem:[%s5 + $0x8] sm:$0xf]
      %v1070 = vld [vmem:[%s5 + $0xc] sm:$0xf]
      %v1071 = vld [vmem:[%s5 + $0x10] sm:$0xf]
      %v1072 = vld [vmem:[%s5 + $0x14] sm:$0xf]
      %v1073 = vld [vmem:[%s5 + $0x18] sm:$0xf]
      %v1074 = vld [vmem:[%s5 + $0x1c] sm:$0xf]
      %v1075 = vld [vmem:[%s5 + $0x20] sm:$0xf]
      %v1076 = vld [vmem:[%s5 + $0x24] sm:$0xf]
      %v1077 = vld [vmem:[%s5 + $0x28] sm:$0xf]
      %v1078 = vld [vmem:[%s5 + $0x2c] sm:$0xf]
      %v1079 = vld [vmem:[%s5 + $0x30] sm:$0xf]
      %v1080 = vld [vmem:[%s5 + $0x34] sm:$0xf]
      %v1081 = vld [vmem:[%s5 + $0x38] sm:$0xf]
      %v1082 = vld [vmem:[%s5 + $0x3c] sm:$0xf]
      %v1083 = vld [vmem:[%s6] sm:$0x1]
      %v1085 = vlaneseq
      %v1086 = vshrl.u32 %v1085, 7
      %v1087 = vsub.s32 0, %v1086
      %v1088 = vrot.slane %v1083, %v1087
      %v1106 = vunpack.c.l.b16 %v1067
      %v1107 = vunpack.c.l.b16 %v1068
      %v1108 = vunpack.c.l.b16 %v1069
      %v1109 = vunpack.c.l.b16 %v1070
      %v1110 = vunpack.c.l.b16 %v1071
      %v1111 = vunpack.c.l.b16 %v1072
      %v1112 = vunpack.c.l.b16 %v1073
      %v1113 = vunpack.c.l.b16 %v1074
      %v1114 = vunpack.c.l.b16 %v1075
      %v1115 = vunpack.c.l.b16 %v1076
      %v1116 = vunpack.c.l.b16 %v1077
      %v1117 = vunpack.c.l.b16 %v1078
      %v1118 = vunpack.c.l.b16 %v1079
      %v1119 = vunpack.c.l.b16 %v1080
      %v1120 = vunpack.c.l.b16 %v1081
      %v1121 = vunpack.c.l.b16 %v1082
      %v1122 = vpack.c.b16 %v1107, %v1106
      %v1123 = vpack.c.b16 %v1109, %v1108
      %v1124 = vpack.c.b16 %v1111, %v1110
      %v1125 = vpack.c.b16 %v1113, %v1112
      %v1126 = vpack.c.b16 %v1115, %v1114
      %v1127 = vpack.c.b16 %v1117, %v1116
      %v1128 = vpack.c.b16 %v1119, %v1118
      %v1129 = vpack.c.b16 %v1121, %v1120
      %1138 = vmatprep.subr.bf16.mxu0 0
      %1139 = vmatpush1.bf16.msra.mxu0 %v1122
      %1140 = vmatprep.subr.bf16.mxu0 0
      %1141 = vmatpush1.bf16.msra.mxu0 %v1123
      %1142 = vmatprep.subr.bf16.mxu0 0
      %1143 = vmatpush1.bf16.msra.mxu0 %v1124
      %1144 = vmatprep.subr.bf16.mxu0 0
      %1145 = vmatpush1.bf16.msra.mxu0 %v1125
      %1146 = vmatprep.subr.bf16.mxu0 0
      %1147 = vmatpush1.bf16.msra.mxu0 %v1126
      %1148 = vmatprep.subr.bf16.mxu0 0
      %1149 = vmatpush1.bf16.msra.mxu0 %v1127
      %1150 = vmatprep.subr.bf16.mxu0 0
      %1151 = vmatpush1.bf16.msra.mxu0 %v1128
      %1152 = vmatprep.subr.bf16.mxu0 0
      %1153 = vmatpush1.bf16.msra.mxu0 %v1129
      %1154 = vmatprep.subr.bf16.mxu0 0
      %1155 = vmatpush1.bf16.msra.mxu0 0
      %1156 = vmatprep.subr.bf16.mxu0 0
      %1157 = vmatpush1.bf16.msra.mxu0 0
      %1158 = vmatprep.subr.bf16.mxu0 0
      %1159 = vmatpush1.bf16.msra.mxu0 0
      %1160 = vmatprep.subr.bf16.mxu0 0
      %1161 = vmatpush1.bf16.msra.mxu0 0
      %1162 = vmatprep.subr.bf16.mxu0 0
      %1163 = vmatpush1.bf16.msra.mxu0 0
      %1164 = vmatprep.subr.bf16.mxu0 0
      %1165 = vmatpush1.bf16.msra.mxu0 0
      %1166 = vmatprep.subr.bf16.mxu0 0
      %1167 = vmatpush1.bf16.msra.mxu0 0
      %1168 = vmatprep.subr.bf16.mxu0 0
      %1169 = vmatpush1.bf16.msra.mxu0 0
      %1170 = vmatprep.mubr.bf16.mxu0 0
      %1171 = vmatmul.mubr.bf16.gmra.mrb[0].mxu0 %v1059
      %v1172 = vpop.f32.mrb[0].mxu0
      %v1173 = vadd.f32 %v1088, %v1172
      %v1174 = vpop.f32.mrb[0].mxu0
      %v1175 = vpop.f32.mrb[0].mxu0
      %v1176 = vadd.f32 %v1088, %v1175
      %v1177 = vpop.f32.mrb[0].mxu0
      %1178 = vmatprep.mubr.bf16.mxu0 0
      %1179 = vmatmul.mubr.bf16.gmra.mrb[0].mxu0 %v1060
      %v1180 = vpop.f32.mrb[0].mxu0
      %v1181 = vadd.f32 %v1088, %v1180
      %v1182 = vpop.f32.mrb[0].mxu0
      %v1183 = vpop.f32.mrb[0].mxu0
      %v1184 = vadd.f32 %v1088, %v1183
      %v1185 = vpop.f32.mrb[0].mxu0
      %1186 = vmatprep.mubr.bf16.mxu0 0
      %1187 = vmatmul.mubr.bf16.gmra.mrb[0].mxu0 %v1061
      %v1188 = vpop.f32.mrb[0].mxu0
      %v1189 = vadd.f32 %v1088, %v1188
      %v1190 = vpop.f32.mrb[0].mxu0
      %v1191 = vpop.f32.mrb[0].mxu0
      %v1192 = vadd.f32 %v1088, %v1191
      %v1193 = vpop.f32.mrb[0].mxu0
      %1194 = vmatprep.mubr.bf16.mxu0 0
      %1195 = vmatmul.mubr.bf16.gmra.mrb[0].mxu0 %v1062
      %v1196 = vpop.f32.mrb[0].mxu0
      %v1197 = vadd.f32 %v1088, %v1196
      %v1198 = vpop.f32.mrb[0].mxu0
      %v1199 = vpop.f32.mrb[0].mxu0
      %v1200 = vadd.f32 %v1088, %v1199
      %v1201 = vpop.f32.mrb[0].mxu0
      %1202 = vmatprep.mubr.bf16.mxu0 0
      %1203 = vmatmul.mubr.bf16.gmra.mrb[0].mxu0 %v1063
      %v1204 = vpop.f32.mrb[0].mxu0
      %v1205 = vadd.f32 %v1088, %v1204
      %v1206 = vpop.f32.mrb[0].mxu0
      %v1207 = vpop.f32.mrb[0].mxu0
      %v1208 = vadd.f32 %v1088, %v1207
      %v1209 = vpop.f32.mrb[0].mxu0
      %1210 = vmatprep.mubr.bf16.mxu0 0
      %1211 = vmatmul.mubr.bf16.gmra.mrb[0].mxu0 %v1064
      %v1212 = vpop.f32.mrb[0].mxu0
      %v1213 = vadd.f32 %v1088, %v1212
      %v1214 = vpop.f32.mrb[0].mxu0
      %v1215 = vpop.f32.mrb[0].mxu0
      %v1216 = vadd.f32 %v1088, %v1215
      %v1217 = vpop.f32.mrb[0].mxu0
      %1218 = vmatprep.mubr.bf16.mxu0 0
      %1219 = vmatmul.mubr.bf16.gmra.mrb[0].mxu0 %v1065
      %v1220 = vpop.f32.mrb[0].mxu0
      %v1221 = vadd.f32 %v1088, %v1220
      %v1222 = vpop.f32.mrb[0].mxu0
      %v1223 = vpop.f32.mrb[0].mxu0
      %v1224 = vadd.f32 %v1088, %v1223
      %v1225 = vpop.f32.mrb[0].mxu0
      %1226 = vmatprep.mubr.bf16.mxu0 0
      %1227 = vmatmul.mubr.bf16.gmra.mrb[0].mxu0 %v1066
      %v1228 = vpop.f32.mrb[0].mxu0
      %v1229 = vadd.f32 %v1088, %v1228
      %v1230 = vpop.f32.mrb[0].mxu0
      %v1231 = vpop.f32.mrb[0].mxu0
      %v1232 = vadd.f32 %v1088, %v1231
      %v1233 = vpop.f32.mrb[0].mxu0
      %1234 = vdwg.mxu0
      %vm1235 = vcmp.gt.f32.partialorder %v1173, 0.0
      %vm1236 = vcmp.gt.f32.partialorder %v1176, 0.0
      %vm1237 = vcmp.gt.f32.partialorder %v1181, 0.0
      %vm1238 = vcmp.gt.f32.partialorder %v1184, 0.0
      %vm1239 = vcmp.gt.f32.partialorder %v1189, 0.0
      %vm1240 = vcmp.gt.f32.partialorder %v1192, 0.0
      %vm1241 = vcmp.gt.f32.partialorder %v1197, 0.0
      %vm1242 = vcmp.gt.f32.partialorder %v1200, 0.0
      %vm1243 = vcmp.gt.f32.partialorder %v1205, 0.0
      %vm1244 = vcmp.gt.f32.partialorder %v1208, 0.0
      %vm1245 = vcmp.gt.f32.partialorder %v1213, 0.0
      %vm1246 = vcmp.gt.f32.partialorder %v1216, 0.0
      %vm1247 = vcmp.gt.f32.partialorder %v1221, 0.0
      %vm1248 = vcmp.gt.f32.partialorder %v1224, 0.0
      %vm1249 = vcmp.gt.f32.partialorder %v1229, 0.0
      %vm1250 = vcmp.gt.f32.partialorder %v1232, 0.0
      %v1251 = vmin.f32 %v1173, 0.0
      %v1252 = vmin.f32 %v1176, 0.0
      %v1253 = vmin.f32 %v1181, 0.0
      %v1254 = vmin.f32 %v1184, 0.0
      %v1255 = vmin.f32 %v1189, 0.0
      %v1256 = vmin.f32 %v1192, 0.0
      %v1257 = vmin.f32 %v1197, 0.0
      %v1258 = vmin.f32 %v1200, 0.0
      %v1259 = vmin.f32 %v1205, 0.0
      %v1260 = vmin.f32 %v1208, 0.0
      %v1261 = vmin.f32 %v1213, 0.0
      %v1262 = vmin.f32 %v1216, 0.0
      %v1263 = vmin.f32 %v1221, 0.0
      %v1264 = vmin.f32 %v1224, 0.0
      %v1265 = vmin.f32 %v1229, 0.0
      %v1266 = vmin.f32 %v1232, 0.0
      %v1267 = vmul.f32 %v1251, 1.442695
      %v1268 = vpow.pop %v1267
      %v1269 = vmul.f32 %v1252, 1.442695
      %v1270 = vpow.pop %v1269
      %v1271 = vmul.f32 %v1253, 1.442695
      %v1272 = vpow.pop %v1271
      %v1273 = vmul.f32 %v1254, 1.442695
      %v1274 = vpow.pop %v1273
      %v1275 = vmul.f32 %v1255, 1.442695
      %v1276 = vpow.pop %v1275
      %v1277 = vmul.f32 %v1256, 1.442695
      %v1278 = vpow.pop %v1277
      %v1279 = vmul.f32 %v1257, 1.442695
      %v1280 = vpow.pop %v1279
      %v1281 = vmul.f32 %v1258, 1.442695
      %v1282 = vpow.pop %v1281
      %v1283 = vmul.f32 %v1259, 1.442695
      %v1284 = vpow.pop %v1283
      %v1285 = vmul.f32 %v1260, 1.442695
      %v1286 = vpow.pop %v1285
      %v1287 = vmul.f32 %v1261, 1.442695
      %v1288 = vpow.pop %v1287
      %v1289 = vmul.f32 %v1262, 1.442695
      %v1290 = vpow.pop %v1289
      %v1291 = vmul.f32 %v1263, 1.442695
      %v1292 = vpow.pop %v1291
      %v1293 = vmul.f32 %v1264, 1.442695
      %v1294 = vpow.pop %v1293
      %v1295 = vmul.f32 %v1265, 1.442695
      %v1296 = vpow.pop %v1295
      %v1297 = vmul.f32 %v1266, 1.442695
      %v1298 = vpow.pop %v1297
      %v1299 = vsub.f32 %v1268, 1.0
      %v1300 = vsub.f32 %v1270, 1.0
      %v1301 = vsub.f32 %v1272, 1.0
      %v1302 = vsub.f32 %v1274, 1.0
      %v1303 = vsub.f32 %v1276, 1.0
      %v1304 = vsub.f32 %v1278, 1.0
      %v1305 = vsub.f32 %v1280, 1.0
      %v1306 = vsub.f32 %v1282, 1.0
      %v1307 = vsub.f32 %v1284, 1.0
      %v1308 = vsub.f32 %v1286, 1.0
      %v1309 = vsub.f32 %v1288, 1.0
      %v1310 = vsub.f32 %v1290, 1.0
      %v1311 = vsub.f32 %v1292, 1.0
      %v1312 = vsub.f32 %v1294, 1.0
      %v1313 = vsub.f32 %v1296, 1.0
      %v1314 = vsub.f32 %v1298, 1.0
      %v1315 = vsel %vm1235, %v1173, %v1299
      %v1316 = vsel %vm1236, %v1176, %v1300
      %v1317 = vsel %vm1237, %v1181, %v1301
      %v1318 = vsel %vm1238, %v1184, %v1302
      %v1319 = vsel %vm1239, %v1189, %v1303
      %v1320 = vsel %vm1240, %v1192, %v1304
      %v1321 = vsel %vm1241, %v1197, %v1305
      %v1322 = vsel %vm1242, %v1200, %v1306
      %v1323 = vsel %vm1243, %v1205, %v1307
      %v1324 = vsel %vm1244, %v1208, %v1308
      %v1325 = vsel %vm1245, %v1213, %v1309
      %v1326 = vsel %vm1246, %v1216, %v1310
      %v1327 = vsel %vm1247, %v1221, %v1311
      %v1328 = vsel %vm1248, %v1224, %v1312
      %v1329 = vsel %vm1249, %v1229, %v1313
      %v1330 = vsel %vm1250, %v1232, %v1314
      %v1331 = vpack.c.bf16 %v1316, %v1315
      %v1332 = vpack.c.bf16 %v1318, %v1317
      %v1333 = vpack.c.bf16 %v1320, %v1319
      %v1334 = vpack.c.bf16 %v1322, %v1321
      %v1335 = vpack.c.bf16 %v1324, %v1323
      %v1336 = vpack.c.bf16 %v1326, %v1325
      %v1337 = vpack.c.bf16 %v1328, %v1327
      %v1338 = vpack.c.bf16 %v1330, %v1329
      %v1339 = vld [vmem:[%s7] sm:$0xf]
      %v1340 = vld [vmem:[%s7 + $0x4] sm:$0xf]
      %v1341 = vld [vmem:[%s7 + $0x8] sm:$0xf]
      %v1342 = vld [vmem:[%s7 + $0xc] sm:$0xf]
      %v1343 = vld [vmem:[%s7 + $0x10] sm:$0xf]
      %v1344 = vld [vmem:[%s7 + $0x14] sm:$0xf]
      %v1345 = vld [vmem:[%s7 + $0x18] sm:$0xf]
      %v1346 = vld [vmem:[%s7 + $0x1c] sm:$0xf]
      %v1347 = vld [vmem:[%s7 + $0x20] sm:$0xf]
      %v1348 = vld [vmem:[%s7 + $0x24] sm:$0xf]
      %v1349 = vld [vmem:[%s7 + $0x28] sm:$0xf]
      %v1350 = vld [vmem:[%s7 + $0x2c] sm:$0xf]
      %v1351 = vld [vmem:[%s7 + $0x30] sm:$0xf]
      %v1352 = vld [vmem:[%s7 + $0x34] sm:$0xf]
      %v1353 = vld [vmem:[%s7 + $0x38] sm:$0xf]
      %v1354 = vld [vmem:[%s7 + $0x3c] sm:$0xf]
      %v1355 = vld [vmem:[%s8] sm:$0x1]
      %v1357 = vlaneseq
      %v1358 = vshrl.u32 %v1357, 7
      %v1359 = vsub.s32 0, %v1358
      %v1360 = vrot.slane %v1355, %v1359
      %v1378 = vunpack.c.l.b16 %v1339
      %v1379 = vunpack.c.l.b16 %v1340
      %v1380 = vunpack.c.l.b16 %v1341
      %v1381 = vunpack.c.l.b16 %v1342
      %v1382 = vunpack.c.l.b16 %v1343
      %v1383 = vunpack.c.l.b16 %v1344
      %v1384 = vunpack.c.l.b16 %v1345
      %v1385 = vunpack.c.l.b16 %v1346
      %v1386 = vunpack.c.l.b16 %v1347
      %v1387 = vunpack.c.l.b16 %v1348
      %v1388 = vunpack.c.l.b16 %v1349
      %v1389 = vunpack.c.l.b16 %v1350
      %v1390 = vunpack.c.l.b16 %v1351
      %v1391 = vunpack.c.l.b16 %v1352
      %v1392 = vunpack.c.l.b16 %v1353
      %v1393 = vunpack.c.l.b16 %v1354
      %v1394 = vpack.c.b16 %v1379, %v1378
      %v1395 = vpack.c.b16 %v1381, %v1380
      %v1396 = vpack.c.b16 %v1383, %v1382
      %v1397 = vpack.c.b16 %v1385, %v1384
      %v1398 = vpack.c.b16 %v1387, %v1386
      %v1399 = vpack.c.b16 %v1389, %v1388
      %v1400 = vpack.c.b16 %v1391, %v1390
      %v1401 = vpack.c.b16 %v1393, %v1392
      %1410 = vmatprep.subr.bf16.mxu0 0
      %1411 = vmatpush1.bf16.msra.mxu0 %v1394
      %1412 = vmatprep.subr.bf16.mxu0 0
      %1413 = vmatpush1.bf16.msra.mxu0 %v1395
      %1414 = vmatprep.subr.bf16.mxu0 0
      %1415 = vmatpush1.bf16.msra.mxu0 %v1396
      %1416 = vmatprep.subr.bf16.mxu0 0
      %1417 = vmatpush1.bf16.msra.mxu0 %v1397
      %1418 = vmatprep.subr.bf16.mxu0 0
      %1419 = vmatpush1.bf16.msra.mxu0 %v1398
      %1420 = vmatprep.subr.bf16.mxu0 0
      %1421 = vmatpush1.bf16.msra.mxu0 %v1399
      %1422 = vmatprep.subr.bf16.mxu0 0
      %1423 = vmatpush1.bf16.msra.mxu0 %v1400
      %1424 = vmatprep.subr.bf16.mxu0 0
      %1425 = vmatpush1.bf16.msra.mxu0 %v1401
      %1426 = vmatprep.subr.bf16.mxu0 0
      %1427 = vmatpush1.bf16.msra.mxu0 0
      %1428 = vmatprep.subr.bf16.mxu0 0
      %1429 = vmatpush1.bf16.msra.mxu0 0
      %1430 = vmatprep.subr.bf16.mxu0 0
      %1431 = vmatpush1.bf16.msra.mxu0 0
      %1432 = vmatprep.subr.bf16.mxu0 0
      %1433 = vmatpush1.bf16.msra.mxu0 0
      %1434 = vmatprep.subr.bf16.mxu0 0
      %1435 = vmatpush1.bf16.msra.mxu0 0
      %1436 = vmatprep.subr.bf16.mxu0 0
      %1437 = vmatpush1.bf16.msra.mxu0 0
      %1438 = vmatprep.subr.bf16.mxu0 0
      %1439 = vmatpush1.bf16.msra.mxu0 0
      %1440 = vmatprep.subr.bf16.mxu0 0
      %1441 = vmatpush1.bf16.msra.mxu0 0
      %1442 = vmatprep.mubr.bf16.mxu0 0
      %1443 = vmatmul.mubr.bf16.gmra.mrb[0].mxu0 %v1331
      %v1444 = vpop.f32.mrb[0].mxu0
      %v1445 = vadd.f32 %v1360, %v1444
      %v1446 = vpop.f32.mrb[0].mxu0
      %v1447 = vpop.f32.mrb[0].mxu0
      %v1448 = vadd.f32 %v1360, %v1447
      %v1449 = vpop.f32.mrb[0].mxu0
      %1450 = vmatprep.mubr.bf16.mxu0 0
      %1451 = vmatmul.mubr.bf16.gmra.mrb[0].mxu0 %v1332
      %v1452 = vpop.f32.mrb[0].mxu0
      %v1453 = vadd.f32 %v1360, %v1452
      %v1454 = vpop.f32.mrb[0].mxu0
      %v1455 = vpop.f32.mrb[0].mxu0
      %v1456 = vadd.f32 %v1360, %v1455
      %v1457 = vpop.f32.mrb[0].mxu0
      %1458 = vmatprep.mubr.bf16.mxu0 0
      %1459 = vmatmul.mubr.bf16.gmra.mrb[0].mxu0 %v1333
      %v1460 = vpop.f32.mrb[0].mxu0
      %v1461 = vadd.f32 %v1360, %v1460
      %v1462 = vpop.f32.mrb[0].mxu0
      %v1463 = vpop.f32.mrb[0].mxu0
      %v1464 = vadd.f32 %v1360, %v1463
      %v1465 = vpop.f32.mrb[0].mxu0
      %1466 = vmatprep.mubr.bf16.mxu0 0
      %1467 = vmatmul.mubr.bf16.gmra.mrb[0].mxu0 %v1334
      %v1468 = vpop.f32.mrb[0].mxu0
      %v1469 = vadd.f32 %v1360, %v1468
      %v1470 = vpop.f32.mrb[0].mxu0
      %v1471 = vpop.f32.mrb[0].mxu0
      %v1472 = vadd.f32 %v1360, %v1471
      %v1473 = vpop.f32.mrb[0].mxu0
      %1474 = vmatprep.mubr.bf16.mxu0 0
      %1475 = vmatmul.mubr.bf16.gmra.mrb[0].mxu0 %v1335
      %v1476 = vpop.f32.mrb[0].mxu0
      %v1477 = vadd.f32 %v1360, %v1476
      %v1478 = vpop.f32.mrb[0].mxu0
      %v1479 = vpop.f32.mrb[0].mxu0
      %v1480 = vadd.f32 %v1360, %v1479
      %v1481 = vpop.f32.mrb[0].mxu0
      %1482 = vmatprep.mubr.bf16.mxu0 0
      %1483 = vmatmul.mubr.bf16.gmra.mrb[0].mxu0 %v1336
      %v1484 = vpop.f32.mrb[0].mxu0
      %v1485 = vadd.f32 %v1360, %v1484
      %v1486 = vpop.f32.mrb[0].mxu0
      %v1487 = vpop.f32.mrb[0].mxu0
      %v1488 = vadd.f32 %v1360, %v1487
      %v1489 = vpop.f32.mrb[0].mxu0
      %1490 = vmatprep.mubr.bf16.mxu0 0
      %1491 = vmatmul.mubr.bf16.gmra.mrb[0].mxu0 %v1337
      %v1492 = vpop.f32.mrb[0].mxu0
      %v1493 = vadd.f32 %v1360, %v1492
      %v1494 = vpop.f32.mrb[0].mxu0
      %v1495 = vpop.f32.mrb[0].mxu0
      %v1496 = vadd.f32 %v1360, %v1495
      %v1497 = vpop.f32.mrb[0].mxu0
      %1498 = vmatprep.mubr.bf16.mxu0 0
      %1499 = vmatmul.mubr.bf16.gmra.mrb[0].mxu0 %v1338
      %v1500 = vpop.f32.mrb[0].mxu0
      %v1501 = vadd.f32 %v1360, %v1500
      %v1502 = vpop.f32.mrb[0].mxu0
      %v1503 = vpop.f32.mrb[0].mxu0
      %v1504 = vadd.f32 %v1360, %v1503
      %v1505 = vpop.f32.mrb[0].mxu0
      %1506 = vdwg.mxu0
      %v1507 = vlaneseq
      %v1508 = vand.u32 %v1507, 127
      %vm1509 = vcmp.eq.s32.totalorder %v1508, 0
      %v1510 = vsub.f32 0.0, %v1445
      %v1511 = vsub.f32 0.0, %v1448
      %v1512 = vsub.f32 0.0, %v1453
      %v1513 = vsub.f32 0.0, %v1456
      %v1514 = vsub.f32 0.0, %v1461
      %v1515 = vsub.f32 0.0, %v1464
      %v1516 = vsub.f32 0.0, %v1469
      %v1517 = vsub.f32 0.0, %v1472
      %v1518 = vsub.f32 0.0, %v1477
      %v1519 = vsub.f32 0.0, %v1480
      %v1520 = vsub.f32 0.0, %v1485
      %v1521 = vsub.f32 0.0, %v1488
      %v1522 = vsub.f32 0.0, %v1493
      %v1523 = vsub.f32 0.0, %v1496
      %v1524 = vsub.f32 0.0, %v1501
      %v1525 = vsub.f32 0.0, %v1504
      %v1526 = vmul.f32 %v1510, 1.442695
      %v1527 = vpow.pop %v1526
      %v1528 = vmul.f32 %v1511, 1.442695
      %v1529 = vpow.pop %v1528
      %v1530 = vmul.f32 %v1512, 1.442695
      %v1531 = vpow.pop %v1530
      %v1532 = vmul.f32 %v1513, 1.442695
      %v1533 = vpow.pop %v1532
      %v1534 = vmul.f32 %v1514, 1.442695
      %v1535 = vpow.pop %v1534
      %v1536 = vmul.f32 %v1515, 1.442695
      %v1537 = vpow.pop %v1536
      %v1538 = vmul.f32 %v1516, 1.442695
      %v1539 = vpow.pop %v1538
      %v1540 = vmul.f32 %v1517, 1.442695
      %v1541 = vpow.pop %v1540
      %v1542 = vmul.f32 %v1518, 1.442695
      %v1543 = vpow.pop %v1542
      %v1544 = vmul.f32 %v1519, 1.442695
      %v1545 = vpow.pop %v1544
      %v1546 = vmul.f32 %v1520, 1.442695
      %v1547 = vpow.pop %v1546
      %v1548 = vmul.f32 %v1521, 1.442695
      %v1549 = vpow.pop %v1548
      %v1550 = vmul.f32 %v1522, 1.442695
      %v1551 = vpow.pop %v1550
      %v1552 = vmul.f32 %v1523, 1.442695
      %v1553 = vpow.pop %v1552
      %v1554 = vmul.f32 %v1524, 1.442695
      %v1555 = vpow.pop %v1554
      %v1556 = vmul.f32 %v1525, 1.442695
      %v1557 = vpow.pop %v1556
      %v1558 = vadd.f32 %v1527, 1.0
      %v1559 = vadd.f32 %v1529, 1.0
      %v1560 = vadd.f32 %v1531, 1.0
      %v1561 = vadd.f32 %v1533, 1.0
      %v1562 = vadd.f32 %v1535, 1.0
      %v1563 = vadd.f32 %v1537, 1.0
      %v1564 = vadd.f32 %v1539, 1.0
      %v1565 = vadd.f32 %v1541, 1.0
      %v1566 = vadd.f32 %v1543, 1.0
      %v1567 = vadd.f32 %v1545, 1.0
      %v1568 = vadd.f32 %v1547, 1.0
      %v1569 = vadd.f32 %v1549, 1.0
      %v1570 = vadd.f32 %v1551, 1.0
      %v1571 = vadd.f32 %v1553, 1.0
      %v1572 = vadd.f32 %v1555, 1.0
      %v1573 = vadd.f32 %v1557, 1.0
      %v1574 = vrcp.pop %v1558
      %v1575 = vmul.f32 1.0, %v1574
      %v1576 = vrcp.pop %v1559
      %v1577 = vmul.f32 1.0, %v1576
      %v1578 = vrcp.pop %v1560
      %v1579 = vmul.f32 1.0, %v1578
      %v1580 = vrcp.pop %v1561
      %v1581 = vmul.f32 1.0, %v1580
      %v1582 = vrcp.pop %v1562
      %v1583 = vmul.f32 1.0, %v1582
      %v1584 = vrcp.pop %v1563
      %v1585 = vmul.f32 1.0, %v1584
      %v1586 = vrcp.pop %v1564
      %v1587 = vmul.f32 1.0, %v1586
      %v1588 = vrcp.pop %v1565
      %v1589 = vmul.f32 1.0, %v1588
      %v1590 = vrcp.pop %v1566
      %v1591 = vmul.f32 1.0, %v1590
      %v1592 = vrcp.pop %v1567
      %v1593 = vmul.f32 1.0, %v1592
      %v1594 = vrcp.pop %v1568
      %v1595 = vmul.f32 1.0, %v1594
      %v1596 = vrcp.pop %v1569
      %v1597 = vmul.f32 1.0, %v1596
      %v1598 = vrcp.pop %v1570
      %v1599 = vmul.f32 1.0, %v1598
      %v1600 = vrcp.pop %v1571
      %v1601 = vmul.f32 1.0, %v1600
      %v1602 = vrcp.pop %v1572
      %v1603 = vmul.f32 1.0, %v1602
      %v1604 = vrcp.pop %v1573
      %v1605 = vmul.f32 1.0, %v1604
      %v1606 = vsel %vm1509, %v1575, %v1445
      %v1607 = vsel %vm1509, %v1577, %v1448
      %v1608 = vsel %vm1509, %v1579, %v1453
      %v1609 = vsel %vm1509, %v1581, %v1456
      %v1610 = vsel %vm1509, %v1583, %v1461
      %v1611 = vsel %vm1509, %v1585, %v1464
      %v1612 = vsel %vm1509, %v1587, %v1469
      %v1613 = vsel %vm1509, %v1589, %v1472
      %v1614 = vsel %vm1509, %v1591, %v1477
      %v1615 = vsel %vm1509, %v1593, %v1480
      %v1616 = vsel %vm1509, %v1595, %v1485
      %v1617 = vsel %vm1509, %v1597, %v1488
      %v1618 = vsel %vm1509, %v1599, %v1493
      %v1619 = vsel %vm1509, %v1601, %v1496
      %v1620 = vsel %vm1509, %v1603, %v1501
      %v1621 = vsel %vm1509, %v1605, %v1504
      %vm1622 = vcmask 64512
      %1623 = vst.msk [vmem:[%s334] sm:$0xff] %vm1622, %v1606
      %1624 = vst.msk [vmem:[%s334 + $0x8] sm:$0xff] %vm1622, %v1607
      %1625 = vst.msk [vmem:[%s334 + $0x10] sm:$0xff] %vm1622, %v1608
      %1626 = vst.msk [vmem:[%s334 + $0x18] sm:$0xff] %vm1622, %v1609
      %1627 = vst.msk [vmem:[%s334 + $0x20] sm:$0xff] %vm1622, %v1610
      %1628 = vst.msk [vmem:[%s334 + $0x28] sm:$0xff] %vm1622, %v1611
      %1629 = vst.msk [vmem:[%s334 + $0x30] sm:$0xff] %vm1622, %v1612
      %1630 = vst.msk [vmem:[%s334 + $0x38] sm:$0xff] %vm1622, %v1613
      %1631 = vst.msk [vmem:[%s334 + $0x40] sm:$0xff] %vm1622, %v1614
      %1632 = vst.msk [vmem:[%s334 + $0x48] sm:$0xff] %vm1622, %v1615
      %1633 = vst.msk [vmem:[%s334 + $0x50] sm:$0xff] %vm1622, %v1616
      %1634 = vst.msk [vmem:[%s334 + $0x58] sm:$0xff] %vm1622, %v1617
      %1635 = vst.msk [vmem:[%s334 + $0x60] sm:$0xff] %vm1622, %v1618
      %1636 = vst.msk [vmem:[%s334 + $0x68] sm:$0xff] %vm1622, %v1619
      %1637 = vst.msk [vmem:[%s334 + $0x70] sm:$0xff] %vm1622, %v1620
      %1638 = vst.msk [vmem:[%s334 + $0x78] sm:$0xff] %vm1622, %v1621
      %s1639 = smul.u32 16, %s20
      %p1640 = scmp.lt.s32.totalorder %s1639, 31
      %s1641 = scalar_select %p1640, %s1639, 31
      %s1642 = smul.addr %s1641, 8
      %s1643 = scalar_lea.vmem %s9, %s1642
      // Predicated region
      $region57: #{dragonnet_forward.1} parent=55 // pred_check
        %p1644 = pneg %p232
      $region58: #{dragonnet_forward.1} parent=55 // pred_check_branch
        %1646 = sbr.rel (%p1644) target = $region60
      $region59: #{dragonnet_forward.1} parent=55 // pred_region
        %s1647 = smul.u32 16, %s20
      $region60: #{dragonnet_forward.1} parent=55 // pred_fallthru
        _
    $region56: #{dragonnet_forward.1} parent=5 // pred_fallthru
      _
    %p1648 = scmp.le.s32.totalorder 2, %s15
    // Predicated region
    $region61: #{dragonnet_forward.1} parent=5 // pred_check
      %p1649 = pneg %p1648
    $region62: #{dragonnet_forward.1} parent=5 // pred_check_branch
      %1651 = sbr.rel (%p1649) target = $region64
    $region63: #{dragonnet_forward.1} parent=5 // pred_region
      %s1652 = ssub.s32 %s15, 2
      // Predicated region
      $region65: #{dragonnet_forward.1} parent=63 // pred_check
        %p1653 = pneg %p238
      $region66: #{dragonnet_forward.1} parent=63 // pred_check_branch
        %1655 = sbr.rel (%p1653) target = $region68
      $region67: #{dragonnet_forward.1} parent=63 // pred_region
        %s1656 = smul.u32 16, %s21
        %p1657 = scmp.lt.s32.totalorder %s1656, 31
        %s1658 = scalar_select %p1657, %s1656, 31
        %s1659 = smul.addr %s1658, 8
        %s1660 = scalar_lea.vmem %s9, %s1659
      $region68: #{dragonnet_forward.1} parent=63 // pred_fallthru
        _
    $region64: #{dragonnet_forward.1} parent=5 // pred_fallthru
      _
  $region6: #{dragonnet_forward.1} parent=0 // loop_footer
    %s19 = sadd.s32 1, %s15
  $region7: #{dragonnet_forward.1} parent=0 // loop_footer_branch
    %14 = sbr.rel target = $region3
  $region8: #{dragonnet_forward.1} parent=0 // loop_exit
    _

</llo_original>
